<compile_context>
chip_gen: v5e
topology: v5e:2x2
jax: 0.10.0
libtpu: 0.0.40
codegen_flags: <defaults>
</compile_context>

<pallas_src>
import jax
import jax.numpy as jnp
from jax.experimental import pallas as pl
from jax.experimental.pallas import tpu as pltpu

# ---- config (small synthetic sizes consistent with the module) ----
IN_CHANS  = 10
N_LABELS  = 25
N_CLASSES = 3 * N_LABELS          # 75
N_PAD     = 128                   # lane-dense padded output width
N_MODELS  = 3
FEAT_DIM  = 64                    # stand-in for edgenext_base's feature_dim
B, H, W   = 2, 16, 16
HW        = H * W


def ensemble_kernel(x_ref, wbd_ref, bbd_ref, wf_ref, bf_ref, wc_ref, bc_ref,
                    out_ref):
    """Single-invocation kernel: all 3 ensemble members computed at once."""
    # (1) all 9 branch "1x1 convs" as one block-diagonal matmul:
    #     [B, HW, 3*C] @ [3*C, 9F] -> [B, HW, 9F]
    y = jnp.einsum('bsc,cf->bsf', x_ref[...], wbd_ref[...],
                   preferred_element_type=jnp.float32)
    y = jnp.maximum(y + bbd_ref[...], 0.0)

    # (2) global average pool over spatial -> per-(model,branch) features [B, 9F]
    pooled = jnp.mean(y, axis=1)

    # (3) per-model fusion Linear(3F -> F) + ReLU, block-diagonal: [9F, 3F]
    fused = jnp.maximum(
        jnp.dot(pooled, wf_ref[...], preferred_element_type=jnp.float32)
        + bf_ref[...], 0.0)                                     # [B, 3F]

    # (4) per-model classifiers stacked along K -> the matmul directly computes
    #     sum_m(fused_m @ wc_m); add summed biases, scale by 1/3 = ensemble mean.
    logits = (jnp.dot(fused, wc_ref[...], preferred_element_type=jnp.float32)
              + bc_ref[...])                                    # [B, N_PAD]
    out_ref[...] = logits * jnp.float32(1.0 / N_MODELS)


def build_fused_params(p):
    """Assemble block-diagonal / stacked weight slabs from per-model params."""
    F, C = FEAT_DIM, IN_CHANS
    branch_w = (p['w1'], p['w2'], p['w3'])
    branch_b = (p['b1'], p['b2'], p['b3'])

    # Branch block-diagonal: rows = branch channels, cols = (model, branch) blocks.
    wbd = jnp.zeros((3 * C, N_MODELS * 3 * F), jnp.float32)
    bbd = jnp.zeros((1, N_MODELS * 3 * F), jnp.float32)
    for m in range(N_MODELS):
        for b in range(3):
            col = (m * 3 + b) * F
            wbd = wbd.at[b * C:(b + 1) * C, col:col + F].set(branch_w[b][m])
            bbd = bbd.at[:, col:col + F].set(branch_b[b][m])

    # Fusion block-diagonal: per-model [3F, F] blocks.
    wf_bd = jnp.zeros((N_MODELS * 3 * F, N_MODELS * F), jnp.float32)
    bf_all = jnp.zeros((1, N_MODELS * F), jnp.float32)
    for m in range(N_MODELS):
        wf_bd = wf_bd.at[m * 3 * F:(m + 1) * 3 * F, m * F:(m + 1) * F].set(p['wf'][m])
        bf_all = bf_all.at[:, m * F:(m + 1) * F].set(p['bf'][m])

    # Classifier stacked along K (so one matmul sums over models); lane-pad to 128.
    wc_stack = jnp.zeros((N_MODELS * F, N_PAD), jnp.float32)
    bc_sum = jnp.zeros((1, N_PAD), jnp.float32)
    for m in range(N_MODELS):
        wc_stack = wc_stack.at[m * F:(m + 1) * F, :N_CLASSES].set(p['wc'][m])
    bc_sum = bc_sum.at[:, :N_CLASSES].set(jnp.sum(p['bc'], axis=0))

    return wbd, bbd, wf_bd, bf_all, wc_stack, bc_sum


def ensemble_forward(x_t1, x_t2, x_ax, p):
    """x_*: NCHW float32 [B, IN_CHANS, H, W]; p: dict of stacked per-model params."""
    # One channel-concat + one transpose (channels-last, flattened spatial):
    # lane dim = 3*IN_CHANS = 30 used of 128 (3x denser than per-branch layout).
    x_cat = jnp.concatenate([x_t1, x_t2, x_ax], axis=1)            # [B, 3C, H, W]
    x_cat = jnp.transpose(x_cat, (0, 2, 3, 1)).reshape(B, HW, 3 * IN_CHANS)

    wbd, bbd, wf_bd, bf_all, wc_stack, bc_sum = build_fused_params(p)

    vmem = pl.BlockSpec(memory_space=pltpu.MemorySpace.VMEM)       # whole array in VMEM
    out_padded = pl.pallas_call(
        ensemble_kernel,
        out_shape=jax.ShapeDtypeStruct((B, N_PAD), jnp.float32),
        in_specs=[vmem] * 7,
        out_specs=pl.BlockSpec(memory_space=pltpu.MemorySpace.VMEM),
    )(x_cat, wbd, bbd, wf_bd, bf_all, wc_stack, bc_sum)

    return out_padded[:, :N_CLASSES]


def init_params(key):
    ks = jax.random.split(key, 10)
    s = 0.05
    return {
        # per-branch pointwise-conv weights, stacked over the 3 ensemble members
        'w1': s * jax.random.normal(ks[0], (N_MODELS, IN_CHANS, FEAT_DIM), jnp.float32),
        'b1': s * jax.random.normal(ks[1], (N_MODELS, 1, FEAT_DIM), jnp.float32),
        'w2': s * jax.random.normal(ks[2], (N_MODELS, IN_CHANS, FEAT_DIM), jnp.float32),
        'b2': s * jax.random.normal(ks[3], (N_MODELS, 1, FEAT_DIM), jnp.float32),
        'w3': s * jax.random.normal(ks[4], (N_MODELS, IN_CHANS, FEAT_DIM), jnp.float32),
        'b3': s * jax.random.normal(ks[5], (N_MODELS, 1, FEAT_DIM), jnp.float32),
        # fusion: Linear(3F -> F) + ReLU (+ Dropout, no-op in eval)
        'wf': s * jax.random.normal(ks[6], (N_MODELS, 3 * FEAT_DIM, FEAT_DIM), jnp.float32),
        'bf': s * jax.random.normal(ks[7], (N_MODELS, 1, FEAT_DIM), jnp.float32),
        # classifier: Linear(F -> N_CLASSES)
        'wc': s * jax.random.normal(ks[8], (N_MODELS, FEAT_DIM, N_CLASSES), jnp.float32),
        'bc': s * jax.random.normal(ks[9], (N_MODELS, 1, N_CLASSES), jnp.float32),
    }


def reference_forward(x_t1, x_t2, x_ax, p):
    """Pure-JAX reference mirroring the PyTorch forward (unfused, per model)."""
    def to_bsc(x):
        return jnp.transpose(x, (0, 2, 3, 1)).reshape(B, HW, IN_CHANS)
    xs = [to_bsc(x_t1), to_bsc(x_t2), to_bsc(x_ax)]
    outs = []
    for m in range(N_MODELS):
        feats = []
        for x, wk, bk in zip(xs, ('w1', 'w2', 'w3'), ('b1', 'b2', 'b3')):
            y = jnp.maximum(jnp.einsum('bsc,cf->bsf', x, p[wk][m]) + p[bk][m], 0.0)
            feats.append(jnp.mean(y, axis=1))
        comb = jnp.concatenate(feats, axis=1)
        fused = jnp.maximum(comb @ p['wf'][m] + p['bf'][m], 0.0)
        outs.append(fused @ p['wc'][m] + p['bc'][m])
    return jnp.mean(jnp.stack(outs), axis=0)


if __name__ == "__main__":
    key = jax.random.PRNGKey(0)
    kx1, kx2, kx3, kp = jax.random.split(key, 4)

    # PyTorch-style NCHW inputs for the three imaging series
    x_sagittal_t1      = jax.random.normal(kx1, (B, IN_CHANS, H, W), jnp.float32)
    x_sagittal_t2_stir = jax.random.normal(kx2, (B, IN_CHANS, H, W), jnp.float32)
    x_axial_t2         = jax.random.normal(kx3, (B, IN_CHANS, H, W), jnp.float32)

    params = init_params(kp)

    out = ensemble_forward(x_sagittal_t1, x_sagittal_t2_stir, x_axial_t2, params)
    out = jax.block_until_ready(out)

    ref = reference_forward(x_sagittal_t1, x_sagittal_t2_stir, x_axial_t2, params)
    assert out.shape == (B, N_CLASSES)
    assert jnp.allclose(out, ref, atol=1e-4, rtol=1e-4), "mismatch vs JAX reference"

    print("KERNEL_OK")
</pallas_src>

<mosaic_0001>
module attributes {stable_mosaic.version = 11 : i64} {
  func.func @ensemble_kernel(%arg0: memref<2x256x30xf32, #tpu.memory_space<vmem>>, %arg1: memref<30x576xf32, #tpu.memory_space<vmem>>, %arg2: memref<1x576xf32, #tpu.memory_space<vmem>>, %arg3: memref<576x192xf32, #tpu.memory_space<vmem>>, %arg4: memref<1x192xf32, #tpu.memory_space<vmem>>, %arg5: memref<192x128xf32, #tpu.memory_space<vmem>>, %arg6: memref<1x128xf32, #tpu.memory_space<vmem>>, %arg7: memref<2x128xf32, #tpu.memory_space<vmem>>) attributes {dimension_semantics = [], scalar_prefetch = 0 : i64, scratch_operands = 0 : i64, tpu.core_type = #tpu.core_type<tc>} {
    %c0 = arith.constant 0 : index
    %c0_0 = arith.constant 0 : index
    %c0_1 = arith.constant 0 : index
    %0 = vector.load %arg0[%c0, %c0_0, %c0_1] : memref<2x256x30xf32, #tpu.memory_space<vmem>>, vector<2x256x30xf32>
    %c0_2 = arith.constant 0 : index
    %c0_3 = arith.constant 0 : index
    %1 = vector.load %arg1[%c0_2, %c0_3] : memref<30x576xf32, #tpu.memory_space<vmem>>, vector<30x576xf32>
    "tpu.trace_start"() <{level = 10 : i32, message = "bsc,cf->bsf"}> : () -> ()
    %cst = arith.constant dense<0.000000e+00> : vector<2x256x576xf32>
    %2 = tpu.matmul %0, %1, %cst {dimension_numbers = #tpu.dot_dimension_numbers<[2], [0], [0, 1], [1], [0, 0, 0, 1, 1, 1], [], []>} : vector<2x256x30xf32>, vector<30x576xf32>, vector<2x256x576xf32> -> vector<2x256x576xf32>
    "tpu.trace_stop"() : () -> ()
    %c0_4 = arith.constant 0 : index
    %c0_5 = arith.constant 0 : index
    %3 = vector.load %arg2[%c0_4, %c0_5] : memref<1x576xf32, #tpu.memory_space<vmem>>, vector<1x576xf32>
    %4 = vector.shape_cast %3 : vector<1x576xf32> to vector<1x1x576xf32>
    %5 = vector.broadcast %4 : vector<1x1x576xf32> to vector<2x256x576xf32>
    %6 = arith.addf %2, %5 : vector<2x256x576xf32>
    %cst_6 = arith.constant 0.000000e+00 : f32
    %7 = vector.broadcast %cst_6 : f32 to vector<2x256x576xf32>
    %8 = arith.maximumf %6, %7 : vector<2x256x576xf32>
    %cst_7 = arith.constant dense<0.000000e+00> : vector<2x576xf32>
    %9 = vector.multi_reduction <add>, %8, %cst_7 [1] : vector<2x256x576xf32> to vector<2x576xf32>
    %cst_8 = arith.constant 2.560000e+02 : f32
    %10 = vector.broadcast %cst_8 : f32 to vector<2x576xf32>
    %11 = arith.divf %9, %10 : vector<2x576xf32>
    %c0_9 = arith.constant 0 : index
    %c0_10 = arith.constant 0 : index
    %12 = vector.load %arg3[%c0_9, %c0_10] : memref<576x192xf32, #tpu.memory_space<vmem>>, vector<576x192xf32>
    %cst_11 = arith.constant dense<0.000000e+00> : vector<2x192xf32>
    %13 = tpu.matmul %11, %12, %cst_11 {dimension_numbers = #tpu.dot_dimension_numbers<[1], [0], [0], [1], [0, 0, 1, 1], [], []>} : vector<2x576xf32>, vector<576x192xf32>, vector<2x192xf32> -> vector<2x192xf32>
    %c0_12 = arith.constant 0 : index
    %c0_13 = arith.constant 0 : index
    %14 = vector.load %arg4[%c0_12, %c0_13] : memref<1x192xf32, #tpu.memory_space<vmem>>, vector<1x192xf32>
    %15 = vector.broadcast %14 : vector<1x192xf32> to vector<2x192xf32>
    %16 = arith.addf %13, %15 : vector<2x192xf32>
    %cst_14 = arith.constant 0.000000e+00 : f32
    %17 = vector.broadcast %cst_14 : f32 to vector<2x192xf32>
    %18 = arith.maximumf %16, %17 : vector<2x192xf32>
    %c0_15 = arith.constant 0 : index
    %c0_16 = arith.constant 0 : index
    %19 = vector.load %arg5[%c0_15, %c0_16] : memref<192x128xf32, #tpu.memory_space<vmem>>, vector<192x128xf32>
    %cst_17 = arith.constant dense<0.000000e+00> : vector<2x128xf32>
    %20 = tpu.matmul %18, %19, %cst_17 {dimension_numbers = #tpu.dot_dimension_numbers<[1], [0], [0], [1], [0, 0, 1, 1], [], []>} : vector<2x192xf32>, vector<192x128xf32>, vector<2x128xf32> -> vector<2x128xf32>
    %c0_18 = arith.constant 0 : index
    %c0_19 = arith.constant 0 : index
    %21 = vector.load %arg6[%c0_18, %c0_19] : memref<1x128xf32, #tpu.memory_space<vmem>>, vector<1x128xf32>
    %22 = vector.broadcast %21 : vector<1x128xf32> to vector<2x128xf32>
    %23 = arith.addf %20, %22 : vector<2x128xf32>
    %cst_20 = arith.constant 0.333333343 : f32
    %24 = vector.broadcast %cst_20 : f32 to vector<2x128xf32>
    %25 = arith.mulf %23, %24 : vector<2x128xf32>
    %c0_21 = arith.constant 0 : index
    %c0_22 = arith.constant 0 : index
    %26 = vector.load %arg7[%c0_21, %c0_22] : memref<2x128xf32, #tpu.memory_space<vmem>>, vector<2x128xf32>
    tpu.vector_store %arg7[%c0_21, %c0_22], %25 {strides = array<i32>} : memref<2x128xf32, #tpu.memory_space<vmem>>, vector<2x128xf32>,
    return
  }
}

</mosaic_0001>

<llo_original>
// kernel: tpu_custom_call.1
$region0: #{tpu_custom_call.1}
  #allocation0 [shape = 'u32[]', space=smem, size = 0x4, offset = 0x4, fixed_abs, tag = 'smem constant byte address 0x4 - core index']
  #allocation1 [shape = 'u32[72,128]{1,0:T(1,128)}', space=vmem, size = 0x9000, scoped, tag = 'internal scratch']
  %s0 = inlined_call_operand.vmem [shape: f32[2,256,30], index: 0, kind: input, shape index: {}]
  %s1 = inlined_call_operand.vmem [shape: f32[30,576], index: 1, kind: input, shape index: {}]
  %s2 = inlined_call_operand.vmem [shape: f32[1,576], index: 2, kind: input, shape index: {}]
  %s3 = inlined_call_operand.vmem [shape: f32[576,192], index: 3, kind: input, shape index: {}]
  %s4 = inlined_call_operand.vmem [shape: f32[1,192], index: 4, kind: input, shape index: {}]
  %s5 = inlined_call_operand.vmem [shape: f32[192,128], index: 5, kind: input, shape index: {}]
  %s6 = inlined_call_operand.vmem [shape: f32[1,128], index: 6, kind: input, shape index: {}]
  %s7 = inlined_call_operand.hbm [shape: f32[2,128], index: 7, kind: output, shape index: {}]
  %s8 = sld [smem:[#allocation0]]
  $region38: #{tpu_custom_call.1} parent=0
    _
  %s10 = ssub.s32 1, %s8
  %s11 = scalar_select 0, %s10, %s8
  $region1: #{tpu_custom_call.1} parent=0
    #allocation2 [shape = 'u8[1024]{0}', space=vmem, size = 0x400, scoped, tag = 'output window, operand 0, single buffered']
    #allocation3 [shape = 's32[1]{0}', space=sflag, size = 0x4, scoped, tag = 'scoped memory for tpu_custom_call.1']
    %12 = vsyncpa [#allocation3], 0
    // Predicated region
    $region2: #{tpu_custom_call.1} parent=1 // pred_check
      _
    $region3: #{tpu_custom_call.1} parent=1 // pred_check_branch
      %14 = sbr.rel (0) target = $region5
    $region4: #{tpu_custom_call.1} parent=1 // pred_region
      _
    $region5: #{tpu_custom_call.1} parent=1 // pred_fallthru
      _
    // Predicated region
    $region6: #{tpu_custom_call.1} parent=1 // pred_check
      _
    $region7: #{tpu_custom_call.1} parent=1 // pred_check_branch
      %16 = sbr.rel (0) target = $region9
    $region8: #{tpu_custom_call.1} parent=1 // pred_region
      _
    $region9: #{tpu_custom_call.1} parent=1 // pred_fallthru
      _
    // Predicated region
    $region10: #{tpu_custom_call.1} parent=1 // pred_check
      _
    $region11: #{tpu_custom_call.1} parent=1 // pred_check_branch
      %18 = sbr.rel (0) target = $region13
    $region12: #{tpu_custom_call.1} parent=1 // pred_region
      _
    $region13: #{tpu_custom_call.1} parent=1 // pred_fallthru
      _
    // Predicated region
    $region14: #{tpu_custom_call.1} parent=1 // pred_check
      _
    $region15: #{tpu_custom_call.1} parent=1 // pred_check_branch
      %20 = sbr.rel (0) target = $region17
    $region16: #{tpu_custom_call.1} parent=1 // pred_region
      _
    $region17: #{tpu_custom_call.1} parent=1 // pred_fallthru
      _
    // Predicated region
    $region18: #{tpu_custom_call.1} parent=1 // pred_check
      _
    $region19: #{tpu_custom_call.1} parent=1 // pred_check_branch
      %22 = sbr.rel (0) target = $region21
    $region20: #{tpu_custom_call.1} parent=1 // pred_region
      _
    $region21: #{tpu_custom_call.1} parent=1 // pred_fallthru
      _
    // Predicated region
    $region22: #{tpu_custom_call.1} parent=1 // pred_check
      _
    $region23: #{tpu_custom_call.1} parent=1 // pred_check_branch
      %24 = sbr.rel (0) target = $region25
    $region24: #{tpu_custom_call.1} parent=1 // pred_region
      _
    $region25: #{tpu_custom_call.1} parent=1 // pred_fallthru
      _
    // Predicated region
    $region26: #{tpu_custom_call.1} parent=1 // pred_check
      _
    $region27: #{tpu_custom_call.1} parent=1 // pred_check_branch
      %26 = sbr.rel (0) target = $region29
    $region28: #{tpu_custom_call.1} parent=1 // pred_region
      _
    $region29: #{tpu_custom_call.1} parent=1 // pred_fallthru
      _
    %v27 = vld [vmem:[%s0] sm:$0xff]
    %v28 = vld [vmem:[%s0 + $0x8] sm:$0xff]
    %v29 = vld [vmem:[%s0 + $0x10] sm:$0xff]
    %v30 = vld [vmem:[%s0 + $0x18] sm:$0xff]
    %v31 = vld [vmem:[%s0 + $0x20] sm:$0xff]
    %v32 = vld [vmem:[%s0 + $0x28] sm:$0xff]
    %v33 = vld [vmem:[%s0 + $0x30] sm:$0xff]
    %v34 = vld [vmem:[%s0 + $0x38] sm:$0xff]
    %v35 = vld [vmem:[%s0 + $0x40] sm:$0xff]
    %v36 = vld [vmem:[%s0 + $0x48] sm:$0xff]
    %v37 = vld [vmem:[%s0 + $0x50] sm:$0xff]
    %v38 = vld [vmem:[%s0 + $0x58] sm:$0xff]
    %v39 = vld [vmem:[%s0 + $0x60] sm:$0xff]
    %v40 = vld [vmem:[%s0 + $0x68] sm:$0xff]
    %v41 = vld [vmem:[%s0 + $0x70] sm:$0xff]
    %v42 = vld [vmem:[%s0 + $0x78] sm:$0xff]
    %v43 = vld [vmem:[%s0 + $0x80] sm:$0xff]
    %v44 = vld [vmem:[%s0 + $0x88] sm:$0xff]
    %v45 = vld [vmem:[%s0 + $0x90] sm:$0xff]
    %v46 = vld [vmem:[%s0 + $0x98] sm:$0xff]
    %v47 = vld [vmem:[%s0 + $0xa0] sm:$0xff]
    %v48 = vld [vmem:[%s0 + $0xa8] sm:$0xff]
    %v49 = vld [vmem:[%s0 + $0xb0] sm:$0xff]
    %v50 = vld [vmem:[%s0 + $0xb8] sm:$0xff]
    %v51 = vld [vmem:[%s0 + $0xc0] sm:$0xff]
    %v52 = vld [vmem:[%s0 + $0xc8] sm:$0xff]
    %v53 = vld [vmem:[%s0 + $0xd0] sm:$0xff]
    %v54 = vld [vmem:[%s0 + $0xd8] sm:$0xff]
    %v55 = vld [vmem:[%s0 + $0xe0] sm:$0xff]
    %v56 = vld [vmem:[%s0 + $0xe8] sm:$0xff]
    %v57 = vld [vmem:[%s0 + $0xf0] sm:$0xff]
    %v58 = vld [vmem:[%s0 + $0xf8] sm:$0xff]
    %v59 = vld [vmem:[%s0 + $0x100] sm:$0xff]
    %v60 = vld [vmem:[%s0 + $0x108] sm:$0xff]
    %v61 = vld [vmem:[%s0 + $0x110] sm:$0xff]
    %v62 = vld [vmem:[%s0 + $0x118] sm:$0xff]
    %v63 = vld [vmem:[%s0 + $0x120] sm:$0xff]
    %v64 = vld [vmem:[%s0 + $0x128] sm:$0xff]
    %v65 = vld [vmem:[%s0 + $0x130] sm:$0xff]
    %v66 = vld [vmem:[%s0 + $0x138] sm:$0xff]
    %v67 = vld [vmem:[%s0 + $0x140] sm:$0xff]
    %v68 = vld [vmem:[%s0 + $0x148] sm:$0xff]
    %v69 = vld [vmem:[%s0 + $0x150] sm:$0xff]
    %v70 = vld [vmem:[%s0 + $0x158] sm:$0xff]
    %v71 = vld [vmem:[%s0 + $0x160] sm:$0xff]
    %v72 = vld [vmem:[%s0 + $0x168] sm:$0xff]
    %v73 = vld [vmem:[%s0 + $0x170] sm:$0xff]
    %v74 = vld [vmem:[%s0 + $0x178] sm:$0xff]
    %v75 = vld [vmem:[%s0 + $0x180] sm:$0xff]
    %v76 = vld [vmem:[%s0 + $0x188] sm:$0xff]
    %v77 = vld [vmem:[%s0 + $0x190] sm:$0xff]
    %v78 = vld [vmem:[%s0 + $0x198] sm:$0xff]
    %v79 = vld [vmem:[%s0 + $0x1a0] sm:$0xff]
    %v80 = vld [vmem:[%s0 + $0x1a8] sm:$0xff]
    %v81 = vld [vmem:[%s0 + $0x1b0] sm:$0xff]
    %v82 = vld [vmem:[%s0 + $0x1b8] sm:$0xff]
    %v83 = vld [vmem:[%s0 + $0x1c0] sm:$0xff]
    %v84 = vld [vmem:[%s0 + $0x1c8] sm:$0xff]
    %v85 = vld [vmem:[%s0 + $0x1d0] sm:$0xff]
    %v86 = vld [vmem:[%s0 + $0x1d8] sm:$0xff]
    %v87 = vld [vmem:[%s0 + $0x1e0] sm:$0xff]
    %v88 = vld [vmem:[%s0 + $0x1e8] sm:$0xff]
    %v89 = vld [vmem:[%s0 + $0x1f0] sm:$0xff]
    %v90 = vld [vmem:[%s0 + $0x1f8] sm:$0xff]
    %v91 = vld [vmem:[%s1] sm:$0xff]
    %v92 = vld [vmem:[%s1 + $0x8] sm:$0xff]
    %v93 = vld [vmem:[%s1 + $0x10] sm:$0xff]
    %v94 = vld [vmem:[%s1 + $0x18] sm:$0xff]
    %v95 = vld [vmem:[%s1 + $0x20] sm:$0xff]
    %v96 = vld [vmem:[%s1 + $0x28] sm:$0xff]
    %v97 = vld [vmem:[%s1 + $0x30] sm:$0xff]
    %v98 = vld [vmem:[%s1 + $0x38] sm:$0xff]
    %v99 = vld [vmem:[%s1 + $0x40] sm:$0xff]
    %v100 = vld [vmem:[%s1 + $0x48] sm:$0xff]
    %v101 = vld [vmem:[%s1 + $0x50] sm:$0xff]
    %v102 = vld [vmem:[%s1 + $0x58] sm:$0xff]
    %v103 = vld [vmem:[%s1 + $0x60] sm:$0xff]
    %v104 = vld [vmem:[%s1 + $0x68] sm:$0xff]
    %v105 = vld [vmem:[%s1 + $0x70] sm:$0xff]
    %v106 = vld [vmem:[%s1 + $0x78] sm:$0x3f]
    %v107 = vld [vmem:[%s1 + $0x80] sm:$0x3f]
    %v108 = vld [vmem:[%s1 + $0x88] sm:$0x3f]
    %v109 = vld [vmem:[%s1 + $0x90] sm:$0x3f]
    %v110 = vld [vmem:[%s1 + $0x98] sm:$0x3f]
    %v111 = vld [vmem:[%s2] sm:$0x1f]
    %v113 = vperm.slane %v111, 0
    %v114 = vperm.slane %v111, 1
    %v115 = vperm.slane %v111, 2
    %v116 = vperm.slane %v111, 3
    %v117 = vperm.slane %v111, 4
    %vm123 = vcmask 244736
    %v125 = vsel %vm123, %v27, 0
    %v128 = vsel %vm123, %v28, 0
    %v131 = vsel %vm123, %v29, 0
    %v134 = vsel %vm123, %v30, 0
    %v137 = vsel %vm123, %v31, 0
    %v140 = vsel %vm123, %v32, 0
    %v143 = vsel %vm123, %v33, 0
    %v146 = vsel %vm123, %v34, 0
    %v149 = vsel %vm123, %v35, 0
    %v152 = vsel %vm123, %v36, 0
    %v155 = vsel %vm123, %v37, 0
    %v158 = vsel %vm123, %v38, 0
    %v161 = vsel %vm123, %v39, 0
    %v164 = vsel %vm123, %v40, 0
    %v167 = vsel %vm123, %v41, 0
    %v170 = vsel %vm123, %v42, 0
    %v173 = vsel %vm123, %v43, 0
    %v176 = vsel %vm123, %v44, 0
    %v179 = vsel %vm123, %v45, 0
    %v182 = vsel %vm123, %v46, 0
    %v185 = vsel %vm123, %v47, 0
    %v188 = vsel %vm123, %v48, 0
    %v191 = vsel %vm123, %v49, 0
    %v194 = vsel %vm123, %v50, 0
    %v197 = vsel %vm123, %v51, 0
    %v200 = vsel %vm123, %v52, 0
    %v203 = vsel %vm123, %v53, 0
    %v206 = vsel %vm123, %v54, 0
    %v209 = vsel %vm123, %v55, 0
    %v212 = vsel %vm123, %v56, 0
    %v215 = vsel %vm123, %v57, 0
    %v218 = vsel %vm123, %v58, 0
    %v221 = vsel %vm123, %v59, 0
    %v224 = vsel %vm123, %v60, 0
    %v227 = vsel %vm123, %v61, 0
    %v230 = vsel %vm123, %v62, 0
    %v233 = vsel %vm123, %v63, 0
    %v236 = vsel %vm123, %v64, 0
    %v239 = vsel %vm123, %v65, 0
    %v242 = vsel %vm123, %v66, 0
    %v245 = vsel %vm123, %v67, 0
    %v248 = vsel %vm123, %v68, 0
    %v251 = vsel %vm123, %v69, 0
    %v254 = vsel %vm123, %v70, 0
    %v257 = vsel %vm123, %v71, 0
    %v260 = vsel %vm123, %v72, 0
    %v263 = vsel %vm123, %v73, 0
    %v266 = vsel %vm123, %v74, 0
    %v269 = vsel %vm123, %v75, 0
    %v272 = vsel %vm123, %v76, 0
    %v275 = vsel %vm123, %v77, 0
    %v278 = vsel %vm123, %v78, 0
    %v281 = vsel %vm123, %v79, 0
    %v284 = vsel %vm123, %v80, 0
    %v287 = vsel %vm123, %v81, 0
    %v290 = vsel %vm123, %v82, 0
    %v293 = vsel %vm123, %v83, 0
    %v296 = vsel %vm123, %v84, 0
    %v299 = vsel %vm123, %v85, 0
    %v302 = vsel %vm123, %v86, 0
    %v305 = vsel %vm123, %v87, 0
    %v308 = vsel %vm123, %v88, 0
    %v311 = vsel %vm123, %v89, 0
    %v314 = vsel %vm123, %v90, 0
    %vm316 = vcmask 1045504
    %v318 = vsel %vm316, %v106, 0
    %v321 = vsel %vm316, %v107, 0
    %v324 = vsel %vm316, %v108, 0
    %v327 = vsel %vm316, %v109, 0
    %v330 = vsel %vm316, %v110, 0
    %332 = vmatpush.msra.mxu0 0.0
    %333 = vmatpush.msra.mxu0 0.0
    %334 = vmatpush.msra.mxu0 0.0
    %335 = vmatpush.msra.mxu0 0.0
    %336 = vmatpush.msra.mxu0 0.0
    %337 = vmatpush.msra.mxu0 0.0
    %338 = vmatpush.msra.mxu0 0.0
    %339 = vmatpush.msra.mxu0 0.0
    %340 = vmatpush.msra.mxu0 0.0
    %341 = vmatpush.msra.mxu0 0.0
    %342 = vmatpush.msra.mxu0 0.0
    %343 = vmatpush.msra.mxu0 0.0
    %344 = vmatpush.msra.mxu0 %v318
    %345 = vmatpush.msra.mxu0 %v101
    %346 = vmatpush.msra.mxu0 %v96
    %347 = vmatpush.msra.mxu0 %v91
    %348 = vmatmul.f32.gmra.mxu0 %v125
    %v349 = vpop.f32.mrf.mxu0
    %v350 = vadd.f32 %v113, %v349
    %351 = vmatmul.f32.gmra.mxu0 %v128
    %v352 = vpop.f32.mrf.mxu0
    %v353 = vadd.f32 %v113, %v352
    %354 = vmatmul.f32.gmra.mxu0 %v131
    %v355 = vpop.f32.mrf.mxu0
    %v356 = vadd.f32 %v113, %v355
    %357 = vmatmul.f32.gmra.mxu0 %v134
    %v358 = vpop.f32.mrf.mxu0
    %v359 = vadd.f32 %v113, %v358
    %360 = vmatmul.f32.gmra.mxu0 %v137
    %v361 = vpop.f32.mrf.mxu0
    %v362 = vadd.f32 %v113, %v361
    %363 = vmatmul.f32.gmra.mxu0 %v140
    %v364 = vpop.f32.mrf.mxu0
    %v365 = vadd.f32 %v113, %v364
    %366 = vmatmul.f32.gmra.mxu0 %v143
    %v367 = vpop.f32.mrf.mxu0
    %v368 = vadd.f32 %v113, %v367
    %369 = vmatmul.f32.gmra.mxu0 %v146
    %v370 = vpop.f32.mrf.mxu0
    %v371 = vadd.f32 %v113, %v370
    %372 = vmatmul.f32.gmra.mxu0 %v149
    %v373 = vpop.f32.mrf.mxu0
    %v374 = vadd.f32 %v113, %v373
    %375 = vmatmul.f32.gmra.mxu0 %v152
    %v376 = vpop.f32.mrf.mxu0
    %v377 = vadd.f32 %v113, %v376
    %378 = vmatmul.f32.gmra.mxu0 %v155
    %v379 = vpop.f32.mrf.mxu0
    %v380 = vadd.f32 %v113, %v379
    %381 = vmatmul.f32.gmra.mxu0 %v158
    %v382 = vpop.f32.mrf.mxu0
    %v383 = vadd.f32 %v113, %v382
    %384 = vmatmul.f32.gmra.mxu0 %v161
    %v385 = vpop.f32.mrf.mxu0
    %v386 = vadd.f32 %v113, %v385
    %387 = vmatmul.f32.gmra.mxu0 %v164
    %v388 = vpop.f32.mrf.mxu0
    %v389 = vadd.f32 %v113, %v388
    %390 = vmatmul.f32.gmra.mxu0 %v167
    %v391 = vpop.f32.mrf.mxu0
    %v392 = vadd.f32 %v113, %v391
    %393 = vmatmul.f32.gmra.mxu0 %v170
    %v394 = vpop.f32.mrf.mxu0
    %v395 = vadd.f32 %v113, %v394
    %396 = vmatmul.f32.gmra.mxu0 %v173
    %v397 = vpop.f32.mrf.mxu0
    %v398 = vadd.f32 %v113, %v397
    %399 = vmatmul.f32.gmra.mxu0 %v176
    %v400 = vpop.f32.mrf.mxu0
    %v401 = vadd.f32 %v113, %v400
    %402 = vmatmul.f32.gmra.mxu0 %v179
    %v403 = vpop.f32.mrf.mxu0
    %v404 = vadd.f32 %v113, %v403
    %405 = vmatmul.f32.gmra.mxu0 %v182
    %v406 = vpop.f32.mrf.mxu0
    %v407 = vadd.f32 %v113, %v406
    %408 = vmatmul.f32.gmra.mxu0 %v185
    %v409 = vpop.f32.mrf.mxu0
    %v410 = vadd.f32 %v113, %v409
    %411 = vmatmul.f32.gmra.mxu0 %v188
    %v412 = vpop.f32.mrf.mxu0
    %v413 = vadd.f32 %v113, %v412
    %414 = vmatmul.f32.gmra.mxu0 %v191
    %v415 = vpop.f32.mrf.mxu0
    %v416 = vadd.f32 %v113, %v415
    %417 = vmatmul.f32.gmra.mxu0 %v194
    %v418 = vpop.f32.mrf.mxu0
    %v419 = vadd.f32 %v113, %v418
    %420 = vmatmul.f32.gmra.mxu0 %v197
    %v421 = vpop.f32.mrf.mxu0
    %v422 = vadd.f32 %v113, %v421
    %423 = vmatmul.f32.gmra.mxu0 %v200
    %v424 = vpop.f32.mrf.mxu0
    %v425 = vadd.f32 %v113, %v424
    %426 = vmatmul.f32.gmra.mxu0 %v203
    %v427 = vpop.f32.mrf.mxu0
    %v428 = vadd.f32 %v113, %v427
    %429 = vmatmul.f32.gmra.mxu0 %v206
    %v430 = vpop.f32.mrf.mxu0
    %v431 = vadd.f32 %v113, %v430
    %432 = vmatmul.f32.gmra.mxu0 %v209
    %v433 = vpop.f32.mrf.mxu0
    %v434 = vadd.f32 %v113, %v433
    %435 = vmatmul.f32.gmra.mxu0 %v212
    %v436 = vpop.f32.mrf.mxu0
    %v437 = vadd.f32 %v113, %v436
    %438 = vmatmul.f32.gmra.mxu0 %v215
    %v439 = vpop.f32.mrf.mxu0
    %v440 = vadd.f32 %v113, %v439
    %441 = vmatmul.f32.gmra.mxu0 %v218
    %v442 = vpop.f32.mrf.mxu0
    %v443 = vadd.f32 %v113, %v442
    %444 = vmatmul.f32.gmra.mxu0 %v221
    %v445 = vpop.f32.mrf.mxu0
    %v446 = vadd.f32 %v113, %v445
    %447 = vmatmul.f32.gmra.mxu0 %v224
    %v448 = vpop.f32.mrf.mxu0
    %v449 = vadd.f32 %v113, %v448
    %450 = vmatmul.f32.gmra.mxu0 %v227
    %v451 = vpop.f32.mrf.mxu0
    %v452 = vadd.f32 %v113, %v451
    %453 = vmatmul.f32.gmra.mxu0 %v230
    %v454 = vpop.f32.mrf.mxu0
    %v455 = vadd.f32 %v113, %v454
    %456 = vmatmul.f32.gmra.mxu0 %v233
    %v457 = vpop.f32.mrf.mxu0
    %v458 = vadd.f32 %v113, %v457
    %459 = vmatmul.f32.gmra.mxu0 %v236
    %v460 = vpop.f32.mrf.mxu0
    %v461 = vadd.f32 %v113, %v460
    %462 = vmatmul.f32.gmra.mxu0 %v239
    %v463 = vpop.f32.mrf.mxu0
    %v464 = vadd.f32 %v113, %v463
    %465 = vmatmul.f32.gmra.mxu0 %v242
    %v466 = vpop.f32.mrf.mxu0
    %v467 = vadd.f32 %v113, %v466
    %468 = vmatmul.f32.gmra.mxu0 %v245
    %v469 = vpop.f32.mrf.mxu0
    %v470 = vadd.f32 %v113, %v469
    %471 = vmatmul.f32.gmra.mxu0 %v248
    %v472 = vpop.f32.mrf.mxu0
    %v473 = vadd.f32 %v113, %v472
    %474 = vmatmul.f32.gmra.mxu0 %v251
    %v475 = vpop.f32.mrf.mxu0
    %v476 = vadd.f32 %v113, %v475
    %477 = vmatmul.f32.gmra.mxu0 %v254
    %v478 = vpop.f32.mrf.mxu0
    %v479 = vadd.f32 %v113, %v478
    %480 = vmatmul.f32.gmra.mxu0 %v257
    %v481 = vpop.f32.mrf.mxu0
    %v482 = vadd.f32 %v113, %v481
    %483 = vmatmul.f32.gmra.mxu0 %v260
    %v484 = vpop.f32.mrf.mxu0
    %v485 = vadd.f32 %v113, %v484
    %486 = vmatmul.f32.gmra.mxu0 %v263
    %v487 = vpop.f32.mrf.mxu0
    %v488 = vadd.f32 %v113, %v487
    %489 = vmatmul.f32.gmra.mxu0 %v266
    %v490 = vpop.f32.mrf.mxu0
    %v491 = vadd.f32 %v113, %v490
    %492 = vmatmul.f32.gmra.mxu0 %v269
    %v493 = vpop.f32.mrf.mxu0
    %v494 = vadd.f32 %v113, %v493
    %495 = vmatmul.f32.gmra.mxu0 %v272
    %v496 = vpop.f32.mrf.mxu0
    %v497 = vadd.f32 %v113, %v496
    %498 = vmatmul.f32.gmra.mxu0 %v275
    %v499 = vpop.f32.mrf.mxu0
    %v500 = vadd.f32 %v113, %v499
    %501 = vmatmul.f32.gmra.mxu0 %v278
    %v502 = vpop.f32.mrf.mxu0
    %v503 = vadd.f32 %v113, %v502
    %504 = vmatmul.f32.gmra.mxu0 %v281
    %v505 = vpop.f32.mrf.mxu0
    %v506 = vadd.f32 %v113, %v505
    %507 = vmatmul.f32.gmra.mxu0 %v284
    %v508 = vpop.f32.mrf.mxu0
    %v509 = vadd.f32 %v113, %v508
    %510 = vmatmul.f32.gmra.mxu0 %v287
    %v511 = vpop.f32.mrf.mxu0
    %v512 = vadd.f32 %v113, %v511
    %513 = vmatmul.f32.gmra.mxu0 %v290
    %v514 = vpop.f32.mrf.mxu0
    %v515 = vadd.f32 %v113, %v514
    %516 = vmatmul.f32.gmra.mxu0 %v293
    %v517 = vpop.f32.mrf.mxu0
    %v518 = vadd.f32 %v113, %v517
    %519 = vmatmul.f32.gmra.mxu0 %v296
    %v520 = vpop.f32.mrf.mxu0
    %v521 = vadd.f32 %v113, %v520
    %522 = vmatmul.f32.gmra.mxu0 %v299
    %v523 = vpop.f32.mrf.mxu0
    %v524 = vadd.f32 %v113, %v523
    %525 = vmatmul.f32.gmra.mxu0 %v302
    %v526 = vpop.f32.mrf.mxu0
    %v527 = vadd.f32 %v113, %v526
    %528 = vmatmul.f32.gmra.mxu0 %v305
    %v529 = vpop.f32.mrf.mxu0
    %v530 = vadd.f32 %v113, %v529
    %531 = vmatmul.f32.gmra.mxu0 %v308
    %v532 = vpop.f32.mrf.mxu0
    %v533 = vadd.f32 %v113, %v532
    %534 = vmatmul.f32.gmra.mxu0 %v311
    %v535 = vpop.f32.mrf.mxu0
    %v536 = vadd.f32 %v113, %v535
    %537 = vmatmul.f32.gmra.mxu0 %v314
    %v538 = vpop.f32.mrf.mxu0
    %v539 = vadd.f32 %v113, %v538
    %540 = vdwg.mxu0
    %541 = vmatpush.msra.mxu0 0.0
    %542 = vmatpush.msra.mxu0 0.0
    %543 = vmatpush.msra.mxu0 0.0
    %544 = vmatpush.msra.mxu0 0.0
    %545 = vmatpush.msra.mxu0 0.0
    %546 = vmatpush.msra.mxu0 0.0
    %547 = vmatpush.msra.mxu0 0.0
    %548 = vmatpush.msra.mxu0 0.0
    %549 = vmatpush.msra.mxu0 0.0
    %550 = vmatpush.msra.mxu0 0.0
    %551 = vmatpush.msra.mxu0 0.0
    %552 = vmatpush.msra.mxu0 0.0
    %553 = vmatpush.msra.mxu0 %v321
    %554 = vmatpush.msra.mxu0 %v102
    %555 = vmatpush.msra.mxu0 %v97
    %556 = vmatpush.msra.mxu0 %v92
    %557 = vmatmul.f32.gmra.mxu0 %v125
    %v558 = vpop.f32.mrf.mxu0
    %v559 = vadd.f32 %v114, %v558
    %560 = vmatmul.f32.gmra.mxu0 %v128
    %v561 = vpop.f32.mrf.mxu0
    %v562 = vadd.f32 %v114, %v561
    %563 = vmatmul.f32.gmra.mxu0 %v131
    %v564 = vpop.f32.mrf.mxu0
    %v565 = vadd.f32 %v114, %v564
    %566 = vmatmul.f32.gmra.mxu0 %v134
    %v567 = vpop.f32.mrf.mxu0
    %v568 = vadd.f32 %v114, %v567
    %569 = vmatmul.f32.gmra.mxu0 %v137
    %v570 = vpop.f32.mrf.mxu0
    %v571 = vadd.f32 %v114, %v570
    %572 = vmatmul.f32.gmra.mxu0 %v140
    %v573 = vpop.f32.mrf.mxu0
    %v574 = vadd.f32 %v114, %v573
    %575 = vmatmul.f32.gmra.mxu0 %v143
    %v576 = vpop.f32.mrf.mxu0
    %v577 = vadd.f32 %v114, %v576
    %578 = vmatmul.f32.gmra.mxu0 %v146
    %v579 = vpop.f32.mrf.mxu0
    %v580 = vadd.f32 %v114, %v579
    %581 = vmatmul.f32.gmra.mxu0 %v149
    %v582 = vpop.f32.mrf.mxu0
    %v583 = vadd.f32 %v114, %v582
    %584 = vmatmul.f32.gmra.mxu0 %v152
    %v585 = vpop.f32.mrf.mxu0
    %v586 = vadd.f32 %v114, %v585
    %587 = vmatmul.f32.gmra.mxu0 %v155
    %v588 = vpop.f32.mrf.mxu0
    %v589 = vadd.f32 %v114, %v588
    %590 = vmatmul.f32.gmra.mxu0 %v158
    %v591 = vpop.f32.mrf.mxu0
    %v592 = vadd.f32 %v114, %v591
    %593 = vmatmul.f32.gmra.mxu0 %v161
    %v594 = vpop.f32.mrf.mxu0
    %v595 = vadd.f32 %v114, %v594
    %596 = vmatmul.f32.gmra.mxu0 %v164
    %v597 = vpop.f32.mrf.mxu0
    %v598 = vadd.f32 %v114, %v597
    %599 = vmatmul.f32.gmra.mxu0 %v167
    %v600 = vpop.f32.mrf.mxu0
    %v601 = vadd.f32 %v114, %v600
    %602 = vmatmul.f32.gmra.mxu0 %v170
    %v603 = vpop.f32.mrf.mxu0
    %v604 = vadd.f32 %v114, %v603
    %605 = vmatmul.f32.gmra.mxu0 %v173
    %v606 = vpop.f32.mrf.mxu0
    %v607 = vadd.f32 %v114, %v606
    %608 = vmatmul.f32.gmra.mxu0 %v176
    %v609 = vpop.f32.mrf.mxu0
    %v610 = vadd.f32 %v114, %v609
    %611 = vmatmul.f32.gmra.mxu0 %v179
    %v612 = vpop.f32.mrf.mxu0
    %v613 = vadd.f32 %v114, %v612
    %614 = vmatmul.f32.gmra.mxu0 %v182
    %v615 = vpop.f32.mrf.mxu0
    %v616 = vadd.f32 %v114, %v615
    %617 = vmatmul.f32.gmra.mxu0 %v185
    %v618 = vpop.f32.mrf.mxu0
    %v619 = vadd.f32 %v114, %v618
    %620 = vmatmul.f32.gmra.mxu0 %v188
    %v621 = vpop.f32.mrf.mxu0
    %v622 = vadd.f32 %v114, %v621
    %623 = vmatmul.f32.gmra.mxu0 %v191
    %v624 = vpop.f32.mrf.mxu0
    %v625 = vadd.f32 %v114, %v624
    %626 = vmatmul.f32.gmra.mxu0 %v194
    %v627 = vpop.f32.mrf.mxu0
    %v628 = vadd.f32 %v114, %v627
    %629 = vmatmul.f32.gmra.mxu0 %v197
    %v630 = vpop.f32.mrf.mxu0
    %v631 = vadd.f32 %v114, %v630
    %632 = vmatmul.f32.gmra.mxu0 %v200
    %v633 = vpop.f32.mrf.mxu0
    %v634 = vadd.f32 %v114, %v633
    %635 = vmatmul.f32.gmra.mxu0 %v203
    %v636 = vpop.f32.mrf.mxu0
    %v637 = vadd.f32 %v114, %v636
    %638 = vmatmul.f32.gmra.mxu0 %v206
    %v639 = vpop.f32.mrf.mxu0
    %v640 = vadd.f32 %v114, %v639
    %641 = vmatmul.f32.gmra.mxu0 %v209
    %v642 = vpop.f32.mrf.mxu0
    %v643 = vadd.f32 %v114, %v642
    %644 = vmatmul.f32.gmra.mxu0 %v212
    %v645 = vpop.f32.mrf.mxu0
    %v646 = vadd.f32 %v114, %v645
    %647 = vmatmul.f32.gmra.mxu0 %v215
    %v648 = vpop.f32.mrf.mxu0
    %v649 = vadd.f32 %v114, %v648
    %650 = vmatmul.f32.gmra.mxu0 %v218
    %v651 = vpop.f32.mrf.mxu0
    %v652 = vadd.f32 %v114, %v651
    %653 = vmatmul.f32.gmra.mxu0 %v221
    %v654 = vpop.f32.mrf.mxu0
    %v655 = vadd.f32 %v114, %v654
    %656 = vmatmul.f32.gmra.mxu0 %v224
    %v657 = vpop.f32.mrf.mxu0
    %v658 = vadd.f32 %v114, %v657
    %659 = vmatmul.f32.gmra.mxu0 %v227
    %v660 = vpop.f32.mrf.mxu0
    %v661 = vadd.f32 %v114, %v660
    %662 = vmatmul.f32.gmra.mxu0 %v230
    %v663 = vpop.f32.mrf.mxu0
    %v664 = vadd.f32 %v114, %v663
    %665 = vmatmul.f32.gmra.mxu0 %v233
    %v666 = vpop.f32.mrf.mxu0
    %v667 = vadd.f32 %v114, %v666
    %668 = vmatmul.f32.gmra.mxu0 %v236
    %v669 = vpop.f32.mrf.mxu0
    %v670 = vadd.f32 %v114, %v669
    %671 = vmatmul.f32.gmra.mxu0 %v239
    %v672 = vpop.f32.mrf.mxu0
    %v673 = vadd.f32 %v114, %v672
    %674 = vmatmul.f32.gmra.mxu0 %v242
    %v675 = vpop.f32.mrf.mxu0
    %v676 = vadd.f32 %v114, %v675
    %677 = vmatmul.f32.gmra.mxu0 %v245
    %v678 = vpop.f32.mrf.mxu0
    %v679 = vadd.f32 %v114, %v678
    %680 = vmatmul.f32.gmra.mxu0 %v248
    %v681 = vpop.f32.mrf.mxu0
    %v682 = vadd.f32 %v114, %v681
    %683 = vmatmul.f32.gmra.mxu0 %v251
    %v684 = vpop.f32.mrf.mxu0
    %v685 = vadd.f32 %v114, %v684
    %686 = vmatmul.f32.gmra.mxu0 %v254
    %v687 = vpop.f32.mrf.mxu0
    %v688 = vadd.f32 %v114, %v687
    %689 = vmatmul.f32.gmra.mxu0 %v257
    %v690 = vpop.f32.mrf.mxu0
    %v691 = vadd.f32 %v114, %v690
    %692 = vmatmul.f32.gmra.mxu0 %v260
    %v693 = vpop.f32.mrf.mxu0
    %v694 = vadd.f32 %v114, %v693
    %695 = vmatmul.f32.gmra.mxu0 %v263
    %v696 = vpop.f32.mrf.mxu0
    %v697 = vadd.f32 %v114, %v696
    %698 = vmatmul.f32.gmra.mxu0 %v266
    %v699 = vpop.f32.mrf.mxu0
    %v700 = vadd.f32 %v114, %v699
    %701 = vmatmul.f32.gmra.mxu0 %v269
    %v702 = vpop.f32.mrf.mxu0
    %v703 = vadd.f32 %v114, %v702
    %704 = vmatmul.f32.gmra.mxu0 %v272
    %v705 = vpop.f32.mrf.mxu0
    %v706 = vadd.f32 %v114, %v705
    %707 = vmatmul.f32.gmra.mxu0 %v275
    %v708 = vpop.f32.mrf.mxu0
    %v709 = vadd.f32 %v114, %v708
    %710 = vmatmul.f32.gmra.mxu0 %v278
    %v711 = vpop.f32.mrf.mxu0
    %v712 = vadd.f32 %v114, %v711
    %713 = vmatmul.f32.gmra.mxu0 %v281
    %v714 = vpop.f32.mrf.mxu0
    %v715 = vadd.f32 %v114, %v714
    %716 = vmatmul.f32.gmra.mxu0 %v284
    %v717 = vpop.f32.mrf.mxu0
    %v718 = vadd.f32 %v114, %v717
    %719 = vmatmul.f32.gmra.mxu0 %v287
    %v720 = vpop.f32.mrf.mxu0
    %v721 = vadd.f32 %v114, %v720
    %722 = vmatmul.f32.gmra.mxu0 %v290
    %v723 = vpop.f32.mrf.mxu0
    %v724 = vadd.f32 %v114, %v723
    %725 = vmatmul.f32.gmra.mxu0 %v293
    %v726 = vpop.f32.mrf.mxu0
    %v727 = vadd.f32 %v114, %v726
    %728 = vmatmul.f32.gmra.mxu0 %v296
    %v729 = vpop.f32.mrf.mxu0
    %v730 = vadd.f32 %v114, %v729
    %731 = vmatmul.f32.gmra.mxu0 %v299
    %v732 = vpop.f32.mrf.mxu0
    %v733 = vadd.f32 %v114, %v732
    %734 = vmatmul.f32.gmra.mxu0 %v302
    %v735 = vpop.f32.mrf.mxu0
    %v736 = vadd.f32 %v114, %v735
    %737 = vmatmul.f32.gmra.mxu0 %v305
    %v738 = vpop.f32.mrf.mxu0
    %v739 = vadd.f32 %v114, %v738
    %740 = vmatmul.f32.gmra.mxu0 %v308
    %v741 = vpop.f32.mrf.mxu0
    %v742 = vadd.f32 %v114, %v741
    %743 = vmatmul.f32.gmra.mxu0 %v311
    %v744 = vpop.f32.mrf.mxu0
    %v745 = vadd.f32 %v114, %v744
    %746 = vmatmul.f32.gmra.mxu0 %v314
    %v747 = vpop.f32.mrf.mxu0
    %v748 = vadd.f32 %v114, %v747
    %749 = vdwg.mxu0
    %750 = vmatpush.msra.mxu0 0.0
    %751 = vmatpush.msra.mxu0 0.0
    %752 = vmatpush.msra.mxu0 0.0
    %753 = vmatpush.msra.mxu0 0.0
    %754 = vmatpush.msra.mxu0 0.0
    %755 = vmatpush.msra.mxu0 0.0
    %756 = vmatpush.msra.mxu0 0.0
    %757 = vmatpush.msra.mxu0 0.0
    %758 = vmatpush.msra.mxu0 0.0
    %759 = vmatpush.msra.mxu0 0.0
    %760 = vmatpush.msra.mxu0 0.0
    %761 = vmatpush.msra.mxu0 0.0
    %762 = vmatpush.msra.mxu0 %v324
    %763 = vmatpush.msra.mxu0 %v103
    %764 = vmatpush.msra.mxu0 %v98
    %765 = vmatpush.msra.mxu0 %v93
    %766 = vmatmul.f32.gmra.mxu0 %v125
    %v767 = vpop.f32.mrf.mxu0
    %v768 = vadd.f32 %v115, %v767
    %769 = vmatmul.f32.gmra.mxu0 %v128
    %v770 = vpop.f32.mrf.mxu0
    %v771 = vadd.f32 %v115, %v770
    %772 = vmatmul.f32.gmra.mxu0 %v131
    %v773 = vpop.f32.mrf.mxu0
    %v774 = vadd.f32 %v115, %v773
    %775 = vmatmul.f32.gmra.mxu0 %v134
    %v776 = vpop.f32.mrf.mxu0
    %v777 = vadd.f32 %v115, %v776
    %778 = vmatmul.f32.gmra.mxu0 %v137
    %v779 = vpop.f32.mrf.mxu0
    %v780 = vadd.f32 %v115, %v779
    %781 = vmatmul.f32.gmra.mxu0 %v140
    %v782 = vpop.f32.mrf.mxu0
    %v783 = vadd.f32 %v115, %v782
    %784 = vmatmul.f32.gmra.mxu0 %v143
    %v785 = vpop.f32.mrf.mxu0
    %v786 = vadd.f32 %v115, %v785
    %787 = vmatmul.f32.gmra.mxu0 %v146
    %v788 = vpop.f32.mrf.mxu0
    %v789 = vadd.f32 %v115, %v788
    %790 = vmatmul.f32.gmra.mxu0 %v149
    %v791 = vpop.f32.mrf.mxu0
    %v792 = vadd.f32 %v115, %v791
    %793 = vmatmul.f32.gmra.mxu0 %v152
    %v794 = vpop.f32.mrf.mxu0
    %v795 = vadd.f32 %v115, %v794
    %796 = vmatmul.f32.gmra.mxu0 %v155
    %v797 = vpop.f32.mrf.mxu0
    %v798 = vadd.f32 %v115, %v797
    %799 = vmatmul.f32.gmra.mxu0 %v158
    %v800 = vpop.f32.mrf.mxu0
    %v801 = vadd.f32 %v115, %v800
    %802 = vmatmul.f32.gmra.mxu0 %v161
    %v803 = vpop.f32.mrf.mxu0
    %v804 = vadd.f32 %v115, %v803
    %805 = vmatmul.f32.gmra.mxu0 %v164
    %v806 = vpop.f32.mrf.mxu0
    %v807 = vadd.f32 %v115, %v806
    %808 = vmatmul.f32.gmra.mxu0 %v167
    %v809 = vpop.f32.mrf.mxu0
    %v810 = vadd.f32 %v115, %v809
    %811 = vmatmul.f32.gmra.mxu0 %v170
    %v812 = vpop.f32.mrf.mxu0
    %v813 = vadd.f32 %v115, %v812
    %814 = vmatmul.f32.gmra.mxu0 %v173
    %v815 = vpop.f32.mrf.mxu0
    %v816 = vadd.f32 %v115, %v815
    %817 = vmatmul.f32.gmra.mxu0 %v176
    %v818 = vpop.f32.mrf.mxu0
    %v819 = vadd.f32 %v115, %v818
    %820 = vmatmul.f32.gmra.mxu0 %v179
    %v821 = vpop.f32.mrf.mxu0
    %v822 = vadd.f32 %v115, %v821
    %823 = vmatmul.f32.gmra.mxu0 %v182
    %v824 = vpop.f32.mrf.mxu0
    %v825 = vadd.f32 %v115, %v824
    %826 = vmatmul.f32.gmra.mxu0 %v185
    %v827 = vpop.f32.mrf.mxu0
    %v828 = vadd.f32 %v115, %v827
    %829 = vmatmul.f32.gmra.mxu0 %v188
    %v830 = vpop.f32.mrf.mxu0
    %v831 = vadd.f32 %v115, %v830
    %832 = vmatmul.f32.gmra.mxu0 %v191
    %v833 = vpop.f32.mrf.mxu0
    %v834 = vadd.f32 %v115, %v833
    %835 = vmatmul.f32.gmra.mxu0 %v194
    %v836 = vpop.f32.mrf.mxu0
    %v837 = vadd.f32 %v115, %v836
    %838 = vmatmul.f32.gmra.mxu0 %v197
    %v839 = vpop.f32.mrf.mxu0
    %v840 = vadd.f32 %v115, %v839
    %841 = vmatmul.f32.gmra.mxu0 %v200
    %v842 = vpop.f32.mrf.mxu0
    %v843 = vadd.f32 %v115, %v842
    %844 = vmatmul.f32.gmra.mxu0 %v203
    %v845 = vpop.f32.mrf.mxu0
    %v846 = vadd.f32 %v115, %v845
    %847 = vmatmul.f32.gmra.mxu0 %v206
    %v848 = vpop.f32.mrf.mxu0
    %v849 = vadd.f32 %v115, %v848
    %850 = vmatmul.f32.gmra.mxu0 %v209
    %v851 = vpop.f32.mrf.mxu0
    %v852 = vadd.f32 %v115, %v851
    %853 = vmatmul.f32.gmra.mxu0 %v212
    %v854 = vpop.f32.mrf.mxu0
    %v855 = vadd.f32 %v115, %v854
    %856 = vmatmul.f32.gmra.mxu0 %v215
    %v857 = vpop.f32.mrf.mxu0
    %v858 = vadd.f32 %v115, %v857
    %859 = vmatmul.f32.gmra.mxu0 %v218
    %v860 = vpop.f32.mrf.mxu0
    %v861 = vadd.f32 %v115, %v860
    %862 = vmatmul.f32.gmra.mxu0 %v221
    %v863 = vpop.f32.mrf.mxu0
    %v864 = vadd.f32 %v115, %v863
    %865 = vmatmul.f32.gmra.mxu0 %v224
    %v866 = vpop.f32.mrf.mxu0
    %v867 = vadd.f32 %v115, %v866
    %868 = vmatmul.f32.gmra.mxu0 %v227
    %v869 = vpop.f32.mrf.mxu0
    %v870 = vadd.f32 %v115, %v869
    %871 = vmatmul.f32.gmra.mxu0 %v230
    %v872 = vpop.f32.mrf.mxu0
    %v873 = vadd.f32 %v115, %v872
    %874 = vmatmul.f32.gmra.mxu0 %v233
    %v875 = vpop.f32.mrf.mxu0
    %v876 = vadd.f32 %v115, %v875
    %877 = vmatmul.f32.gmra.mxu0 %v236
    %v878 = vpop.f32.mrf.mxu0
    %v879 = vadd.f32 %v115, %v878
    %880 = vmatmul.f32.gmra.mxu0 %v239
    %v881 = vpop.f32.mrf.mxu0
    %v882 = vadd.f32 %v115, %v881
    %883 = vmatmul.f32.gmra.mxu0 %v242
    %v884 = vpop.f32.mrf.mxu0
    %v885 = vadd.f32 %v115, %v884
    %886 = vmatmul.f32.gmra.mxu0 %v245
    %v887 = vpop.f32.mrf.mxu0
    %v888 = vadd.f32 %v115, %v887
    %889 = vmatmul.f32.gmra.mxu0 %v248
    %v890 = vpop.f32.mrf.mxu0
    %v891 = vadd.f32 %v115, %v890
    %892 = vmatmul.f32.gmra.mxu0 %v251
    %v893 = vpop.f32.mrf.mxu0
    %v894 = vadd.f32 %v115, %v893
    %895 = vmatmul.f32.gmra.mxu0 %v254
    %v896 = vpop.f32.mrf.mxu0
    %v897 = vadd.f32 %v115, %v896
    %898 = vmatmul.f32.gmra.mxu0 %v257
    %v899 = vpop.f32.mrf.mxu0
    %v900 = vadd.f32 %v115, %v899
    %901 = vmatmul.f32.gmra.mxu0 %v260
    %v902 = vpop.f32.mrf.mxu0
    %v903 = vadd.f32 %v115, %v902
    %904 = vmatmul.f32.gmra.mxu0 %v263
    %v905 = vpop.f32.mrf.mxu0
    %v906 = vadd.f32 %v115, %v905
    %907 = vmatmul.f32.gmra.mxu0 %v266
    %v908 = vpop.f32.mrf.mxu0
    %v909 = vadd.f32 %v115, %v908
    %910 = vmatmul.f32.gmra.mxu0 %v269
    %v911 = vpop.f32.mrf.mxu0
    %v912 = vadd.f32 %v115, %v911
    %913 = vmatmul.f32.gmra.mxu0 %v272
    %v914 = vpop.f32.mrf.mxu0
    %v915 = vadd.f32 %v115, %v914
    %916 = vmatmul.f32.gmra.mxu0 %v275
    %v917 = vpop.f32.mrf.mxu0
    %v918 = vadd.f32 %v115, %v917
    %919 = vmatmul.f32.gmra.mxu0 %v278
    %v920 = vpop.f32.mrf.mxu0
    %v921 = vadd.f32 %v115, %v920
    %922 = vmatmul.f32.gmra.mxu0 %v281
    %v923 = vpop.f32.mrf.mxu0
    %v924 = vadd.f32 %v115, %v923
    %925 = vmatmul.f32.gmra.mxu0 %v284
    %v926 = vpop.f32.mrf.mxu0
    %v927 = vadd.f32 %v115, %v926
    %928 = vmatmul.f32.gmra.mxu0 %v287
    %v929 = vpop.f32.mrf.mxu0
    %v930 = vadd.f32 %v115, %v929
    %931 = vmatmul.f32.gmra.mxu0 %v290
    %v932 = vpop.f32.mrf.mxu0
    %v933 = vadd.f32 %v115, %v932
    %934 = vmatmul.f32.gmra.mxu0 %v293
    %v935 = vpop.f32.mrf.mxu0
    %v936 = vadd.f32 %v115, %v935
    %937 = vmatmul.f32.gmra.mxu0 %v296
    %v938 = vpop.f32.mrf.mxu0
    %v939 = vadd.f32 %v115, %v938
    %940 = vmatmul.f32.gmra.mxu0 %v299
    %v941 = vpop.f32.mrf.mxu0
    %v942 = vadd.f32 %v115, %v941
    %943 = vmatmul.f32.gmra.mxu0 %v302
    %v944 = vpop.f32.mrf.mxu0
    %v945 = vadd.f32 %v115, %v944
    %946 = vmatmul.f32.gmra.mxu0 %v305
    %v947 = vpop.f32.mrf.mxu0
    %v948 = vadd.f32 %v115, %v947
    %949 = vmatmul.f32.gmra.mxu0 %v308
    %v950 = vpop.f32.mrf.mxu0
    %v951 = vadd.f32 %v115, %v950
    %952 = vmatmul.f32.gmra.mxu0 %v311
    %v953 = vpop.f32.mrf.mxu0
    %v954 = vadd.f32 %v115, %v953
    %955 = vmatmul.f32.gmra.mxu0 %v314
    %v956 = vpop.f32.mrf.mxu0
    %v957 = vadd.f32 %v115, %v956
    %958 = vdwg.mxu0
    %959 = vmatpush.msra.mxu0 0.0
    %960 = vmatpush.msra.mxu0 0.0
    %961 = vmatpush.msra.mxu0 0.0
    %962 = vmatpush.msra.mxu0 0.0
    %963 = vmatpush.msra.mxu0 0.0
    %964 = vmatpush.msra.mxu0 0.0
    %965 = vmatpush.msra.mxu0 0.0
    %966 = vmatpush.msra.mxu0 0.0
    %967 = vmatpush.msra.mxu0 0.0
    %968 = vmatpush.msra.mxu0 0.0
    %969 = vmatpush.msra.mxu0 0.0
    %970 = vmatpush.msra.mxu0 0.0
    %971 = vmatpush.msra.mxu0 %v327
    %972 = vmatpush.msra.mxu0 %v104
    %973 = vmatpush.msra.mxu0 %v99
    %974 = vmatpush.msra.mxu0 %v94
    %975 = vmatmul.f32.gmra.mxu0 %v125
    %v976 = vpop.f32.mrf.mxu0
    %v977 = vadd.f32 %v116, %v976
    %978 = vmatmul.f32.gmra.mxu0 %v128
    %v979 = vpop.f32.mrf.mxu0
    %v980 = vadd.f32 %v116, %v979
    %981 = vmatmul.f32.gmra.mxu0 %v131
    %v982 = vpop.f32.mrf.mxu0
    %v983 = vadd.f32 %v116, %v982
    %984 = vmatmul.f32.gmra.mxu0 %v134
    %v985 = vpop.f32.mrf.mxu0
    %v986 = vadd.f32 %v116, %v985
    %987 = vmatmul.f32.gmra.mxu0 %v137
    %v988 = vpop.f32.mrf.mxu0
    %v989 = vadd.f32 %v116, %v988
    %990 = vmatmul.f32.gmra.mxu0 %v140
    %v991 = vpop.f32.mrf.mxu0
    %v992 = vadd.f32 %v116, %v991
    %993 = vmatmul.f32.gmra.mxu0 %v143
    %v994 = vpop.f32.mrf.mxu0
    %v995 = vadd.f32 %v116, %v994
    %996 = vmatmul.f32.gmra.mxu0 %v146
    %v997 = vpop.f32.mrf.mxu0
    %v998 = vadd.f32 %v116, %v997
    %999 = vmatmul.f32.gmra.mxu0 %v149
    %v1000 = vpop.f32.mrf.mxu0
    %v1001 = vadd.f32 %v116, %v1000
    %1002 = vmatmul.f32.gmra.mxu0 %v152
    %v1003 = vpop.f32.mrf.mxu0
    %v1004 = vadd.f32 %v116, %v1003
    %1005 = vmatmul.f32.gmra.mxu0 %v155
    %v1006 = vpop.f32.mrf.mxu0
    %v1007 = vadd.f32 %v116, %v1006
    %1008 = vmatmul.f32.gmra.mxu0 %v158
    %v1009 = vpop.f32.mrf.mxu0
    %v1010 = vadd.f32 %v116, %v1009
    %1011 = vmatmul.f32.gmra.mxu0 %v161
    %v1012 = vpop.f32.mrf.mxu0
    %v1013 = vadd.f32 %v116, %v1012
    %1014 = vmatmul.f32.gmra.mxu0 %v164
    %v1015 = vpop.f32.mrf.mxu0
    %v1016 = vadd.f32 %v116, %v1015
    %1017 = vmatmul.f32.gmra.mxu0 %v167
    %v1018 = vpop.f32.mrf.mxu0
    %v1019 = vadd.f32 %v116, %v1018
    %1020 = vmatmul.f32.gmra.mxu0 %v170
    %v1021 = vpop.f32.mrf.mxu0
    %v1022 = vadd.f32 %v116, %v1021
    %1023 = vmatmul.f32.gmra.mxu0 %v173
    %v1024 = vpop.f32.mrf.mxu0
    %v1025 = vadd.f32 %v116, %v1024
    %1026 = vmatmul.f32.gmra.mxu0 %v176
    %v1027 = vpop.f32.mrf.mxu0
    %v1028 = vadd.f32 %v116, %v1027
    %1029 = vmatmul.f32.gmra.mxu0 %v179
    %v1030 = vpop.f32.mrf.mxu0
    %v1031 = vadd.f32 %v116, %v1030
    %1032 = vmatmul.f32.gmra.mxu0 %v182
    %v1033 = vpop.f32.mrf.mxu0
    %v1034 = vadd.f32 %v116, %v1033
    %1035 = vmatmul.f32.gmra.mxu0 %v185
    %v1036 = vpop.f32.mrf.mxu0
    %v1037 = vadd.f32 %v116, %v1036
    %1038 = vmatmul.f32.gmra.mxu0 %v188
    %v1039 = vpop.f32.mrf.mxu0
    %v1040 = vadd.f32 %v116, %v1039
    %1041 = vmatmul.f32.gmra.mxu0 %v191
    %v1042 = vpop.f32.mrf.mxu0
    %v1043 = vadd.f32 %v116, %v1042
    %1044 = vmatmul.f32.gmra.mxu0 %v194
    %v1045 = vpop.f32.mrf.mxu0
    %v1046 = vadd.f32 %v116, %v1045
    %1047 = vmatmul.f32.gmra.mxu0 %v197
    %v1048 = vpop.f32.mrf.mxu0
    %v1049 = vadd.f32 %v116, %v1048
    %1050 = vmatmul.f32.gmra.mxu0 %v200
    %v1051 = vpop.f32.mrf.mxu0
    %v1052 = vadd.f32 %v116, %v1051
    %1053 = vmatmul.f32.gmra.mxu0 %v203
    %v1054 = vpop.f32.mrf.mxu0
    %v1055 = vadd.f32 %v116, %v1054
    %1056 = vmatmul.f32.gmra.mxu0 %v206
    %v1057 = vpop.f32.mrf.mxu0
    %v1058 = vadd.f32 %v116, %v1057
    %1059 = vmatmul.f32.gmra.mxu0 %v209
    %v1060 = vpop.f32.mrf.mxu0
    %v1061 = vadd.f32 %v116, %v1060
    %1062 = vmatmul.f32.gmra.mxu0 %v212
    %v1063 = vpop.f32.mrf.mxu0
    %v1064 = vadd.f32 %v116, %v1063
    %1065 = vmatmul.f32.gmra.mxu0 %v215
    %v1066 = vpop.f32.mrf.mxu0
    %v1067 = vadd.f32 %v116, %v1066
    %1068 = vmatmul.f32.gmra.mxu0 %v218
    %v1069 = vpop.f32.mrf.mxu0
    %v1070 = vadd.f32 %v116, %v1069
    %1071 = vmatmul.f32.gmra.mxu0 %v221
    %v1072 = vpop.f32.mrf.mxu0
    %v1073 = vadd.f32 %v116, %v1072
    %1074 = vmatmul.f32.gmra.mxu0 %v224
    %v1075 = vpop.f32.mrf.mxu0
    %v1076 = vadd.f32 %v116, %v1075
    %1077 = vmatmul.f32.gmra.mxu0 %v227
    %v1078 = vpop.f32.mrf.mxu0
    %v1079 = vadd.f32 %v116, %v1078
    %1080 = vmatmul.f32.gmra.mxu0 %v230
    %v1081 = vpop.f32.mrf.mxu0
    %v1082 = vadd.f32 %v116, %v1081
    %1083 = vmatmul.f32.gmra.mxu0 %v233
    %v1084 = vpop.f32.mrf.mxu0
    %v1085 = vadd.f32 %v116, %v1084
    %1086 = vmatmul.f32.gmra.mxu0 %v236
    %v1087 = vpop.f32.mrf.mxu0
    %v1088 = vadd.f32 %v116, %v1087
    %1089 = vmatmul.f32.gmra.mxu0 %v239
    %v1090 = vpop.f32.mrf.mxu0
    %v1091 = vadd.f32 %v116, %v1090
    %1092 = vmatmul.f32.gmra.mxu0 %v242
    %v1093 = vpop.f32.mrf.mxu0
    %v1094 = vadd.f32 %v116, %v1093
    %1095 = vmatmul.f32.gmra.mxu0 %v245
    %v1096 = vpop.f32.mrf.mxu0
    %v1097 = vadd.f32 %v116, %v1096
    %1098 = vmatmul.f32.gmra.mxu0 %v248
    %v1099 = vpop.f32.mrf.mxu0
    %v1100 = vadd.f32 %v116, %v1099
    %1101 = vmatmul.f32.gmra.mxu0 %v251
    %v1102 = vpop.f32.mrf.mxu0
    %v1103 = vadd.f32 %v116, %v1102
    %1104 = vmatmul.f32.gmra.mxu0 %v254
    %v1105 = vpop.f32.mrf.mxu0
    %v1106 = vadd.f32 %v116, %v1105
    %1107 = vmatmul.f32.gmra.mxu0 %v257
    %v1108 = vpop.f32.mrf.mxu0
    %v1109 = vadd.f32 %v116, %v1108
    %1110 = vmatmul.f32.gmra.mxu0 %v260
    %v1111 = vpop.f32.mrf.mxu0
    %v1112 = vadd.f32 %v116, %v1111
    %1113 = vmatmul.f32.gmra.mxu0 %v263
    %v1114 = vpop.f32.mrf.mxu0
    %v1115 = vadd.f32 %v116, %v1114
    %1116 = vmatmul.f32.gmra.mxu0 %v266
    %v1117 = vpop.f32.mrf.mxu0
    %v1118 = vadd.f32 %v116, %v1117
    %1119 = vmatmul.f32.gmra.mxu0 %v269
    %v1120 = vpop.f32.mrf.mxu0
    %v1121 = vadd.f32 %v116, %v1120
    %1122 = vmatmul.f32.gmra.mxu0 %v272
    %v1123 = vpop.f32.mrf.mxu0
    %v1124 = vadd.f32 %v116, %v1123
    %1125 = vmatmul.f32.gmra.mxu0 %v275
    %v1126 = vpop.f32.mrf.mxu0
    %v1127 = vadd.f32 %v116, %v1126
    %1128 = vmatmul.f32.gmra.mxu0 %v278
    %v1129 = vpop.f32.mrf.mxu0
    %v1130 = vadd.f32 %v116, %v1129
    %1131 = vmatmul.f32.gmra.mxu0 %v281
    %v1132 = vpop.f32.mrf.mxu0
    %v1133 = vadd.f32 %v116, %v1132
    %1134 = vmatmul.f32.gmra.mxu0 %v284
    %v1135 = vpop.f32.mrf.mxu0
    %v1136 = vadd.f32 %v116, %v1135
    %1137 = vmatmul.f32.gmra.mxu0 %v287
    %v1138 = vpop.f32.mrf.mxu0
    %v1139 = vadd.f32 %v116, %v1138
    %1140 = vmatmul.f32.gmra.mxu0 %v290
    %v1141 = vpop.f32.mrf.mxu0
    %v1142 = vadd.f32 %v116, %v1141
    %1143 = vmatmul.f32.gmra.mxu0 %v293
    %v1144 = vpop.f32.mrf.mxu0
    %v1145 = vadd.f32 %v116, %v1144
    %1146 = vmatmul.f32.gmra.mxu0 %v296
    %v1147 = vpop.f32.mrf.mxu0
    %v1148 = vadd.f32 %v116, %v1147
    %1149 = vmatmul.f32.gmra.mxu0 %v299
    %v1150 = vpop.f32.mrf.mxu0
    %v1151 = vadd.f32 %v116, %v1150
    %1152 = vmatmul.f32.gmra.mxu0 %v302
    %v1153 = vpop.f32.mrf.mxu0
    %v1154 = vadd.f32 %v116, %v1153
    %1155 = vmatmul.f32.gmra.mxu0 %v305
    %v1156 = vpop.f32.mrf.mxu0
    %v1157 = vadd.f32 %v116, %v1156
    %1158 = vmatmul.f32.gmra.mxu0 %v308
    %v1159 = vpop.f32.mrf.mxu0
    %v1160 = vadd.f32 %v116, %v1159
    %1161 = vmatmul.f32.gmra.mxu0 %v311
    %v1162 = vpop.f32.mrf.mxu0
    %v1163 = vadd.f32 %v116, %v1162
    %1164 = vmatmul.f32.gmra.mxu0 %v314
    %v1165 = vpop.f32.mrf.mxu0
    %v1166 = vadd.f32 %v116, %v1165
    %1167 = vdwg.mxu0
    %1168 = vmatpush.msra.mxu0 0.0
    %1169 = vmatpush.msra.mxu0 0.0
    %1170 = vmatpush.msra.mxu0 0.0
    %1171 = vmatpush.msra.mxu0 0.0
    %1172 = vmatpush.msra.mxu0 0.0
    %1173 = vmatpush.msra.mxu0 0.0
    %1174 = vmatpush.msra.mxu0 0.0
    %1175 = vmatpush.msra.mxu0 0.0
    %1176 = vmatpush.msra.mxu0 0.0
    %1177 = vmatpush.msra.mxu0 0.0
    %1178 = vmatpush.msra.mxu0 0.0
    %1179 = vmatpush.msra.mxu0 0.0
    %1180 = vmatpush.msra.mxu0 %v330
    %1181 = vmatpush.msra.mxu0 %v105
    %1182 = vmatpush.msra.mxu0 %v100
    %1183 = vmatpush.msra.mxu0 %v95
    %1184 = vmatmul.f32.gmra.mxu0 %v125
    %v1185 = vpop.f32.mrf.mxu0
    %v1186 = vadd.f32 %v117, %v1185
    %1187 = vmatmul.f32.gmra.mxu0 %v128
    %v1188 = vpop.f32.mrf.mxu0
    %v1189 = vadd.f32 %v117, %v1188
    %1190 = vmatmul.f32.gmra.mxu0 %v131
    %v1191 = vpop.f32.mrf.mxu0
    %v1192 = vadd.f32 %v117, %v1191
    %1193 = vmatmul.f32.gmra.mxu0 %v134
    %v1194 = vpop.f32.mrf.mxu0
    %v1195 = vadd.f32 %v117, %v1194
    %1196 = vmatmul.f32.gmra.mxu0 %v137
    %v1197 = vpop.f32.mrf.mxu0
    %v1198 = vadd.f32 %v117, %v1197
    %1199 = vmatmul.f32.gmra.mxu0 %v140
    %v1200 = vpop.f32.mrf.mxu0
    %v1201 = vadd.f32 %v117, %v1200
    %1202 = vmatmul.f32.gmra.mxu0 %v143
    %v1203 = vpop.f32.mrf.mxu0
    %v1204 = vadd.f32 %v117, %v1203
    %1205 = vmatmul.f32.gmra.mxu0 %v146
    %v1206 = vpop.f32.mrf.mxu0
    %v1207 = vadd.f32 %v117, %v1206
    %1208 = vmatmul.f32.gmra.mxu0 %v149
    %v1209 = vpop.f32.mrf.mxu0
    %v1210 = vadd.f32 %v117, %v1209
    %1211 = vmatmul.f32.gmra.mxu0 %v152
    %v1212 = vpop.f32.mrf.mxu0
    %v1213 = vadd.f32 %v117, %v1212
    %1214 = vmatmul.f32.gmra.mxu0 %v155
    %v1215 = vpop.f32.mrf.mxu0
    %v1216 = vadd.f32 %v117, %v1215
    %1217 = vmatmul.f32.gmra.mxu0 %v158
    %v1218 = vpop.f32.mrf.mxu0
    %v1219 = vadd.f32 %v117, %v1218
    %1220 = vmatmul.f32.gmra.mxu0 %v161
    %v1221 = vpop.f32.mrf.mxu0
    %v1222 = vadd.f32 %v117, %v1221
    %1223 = vmatmul.f32.gmra.mxu0 %v164
    %v1224 = vpop.f32.mrf.mxu0
    %v1225 = vadd.f32 %v117, %v1224
    %1226 = vmatmul.f32.gmra.mxu0 %v167
    %v1227 = vpop.f32.mrf.mxu0
    %v1228 = vadd.f32 %v117, %v1227
    %1229 = vmatmul.f32.gmra.mxu0 %v170
    %v1230 = vpop.f32.mrf.mxu0
    %v1231 = vadd.f32 %v117, %v1230
    %1232 = vmatmul.f32.gmra.mxu0 %v173
    %v1233 = vpop.f32.mrf.mxu0
    %v1234 = vadd.f32 %v117, %v1233
    %1235 = vmatmul.f32.gmra.mxu0 %v176
    %v1236 = vpop.f32.mrf.mxu0
    %v1237 = vadd.f32 %v117, %v1236
    %1238 = vmatmul.f32.gmra.mxu0 %v179
    %v1239 = vpop.f32.mrf.mxu0
    %v1240 = vadd.f32 %v117, %v1239
    %1241 = vmatmul.f32.gmra.mxu0 %v182
    %v1242 = vpop.f32.mrf.mxu0
    %v1243 = vadd.f32 %v117, %v1242
    %1244 = vmatmul.f32.gmra.mxu0 %v185
    %v1245 = vpop.f32.mrf.mxu0
    %v1246 = vadd.f32 %v117, %v1245
    %1247 = vmatmul.f32.gmra.mxu0 %v188
    %v1248 = vpop.f32.mrf.mxu0
    %v1249 = vadd.f32 %v117, %v1248
    %1250 = vmatmul.f32.gmra.mxu0 %v191
    %v1251 = vpop.f32.mrf.mxu0
    %v1252 = vadd.f32 %v117, %v1251
    %1253 = vmatmul.f32.gmra.mxu0 %v194
    %v1254 = vpop.f32.mrf.mxu0
    %v1255 = vadd.f32 %v117, %v1254
    %1256 = vmatmul.f32.gmra.mxu0 %v197
    %v1257 = vpop.f32.mrf.mxu0
    %v1258 = vadd.f32 %v117, %v1257
    %1259 = vmatmul.f32.gmra.mxu0 %v200
    %v1260 = vpop.f32.mrf.mxu0
    %v1261 = vadd.f32 %v117, %v1260
    %1262 = vmatmul.f32.gmra.mxu0 %v203
    %v1263 = vpop.f32.mrf.mxu0
    %v1264 = vadd.f32 %v117, %v1263
    %1265 = vmatmul.f32.gmra.mxu0 %v206
    %v1266 = vpop.f32.mrf.mxu0
    %v1267 = vadd.f32 %v117, %v1266
    %1268 = vmatmul.f32.gmra.mxu0 %v209
    %v1269 = vpop.f32.mrf.mxu0
    %v1270 = vadd.f32 %v117, %v1269
    %1271 = vmatmul.f32.gmra.mxu0 %v212
    %v1272 = vpop.f32.mrf.mxu0
    %v1273 = vadd.f32 %v117, %v1272
    %1274 = vmatmul.f32.gmra.mxu0 %v215
    %v1275 = vpop.f32.mrf.mxu0
    %v1276 = vadd.f32 %v117, %v1275
    %1277 = vmatmul.f32.gmra.mxu0 %v218
    %v1278 = vpop.f32.mrf.mxu0
    %v1279 = vadd.f32 %v117, %v1278
    %1280 = vmatmul.f32.gmra.mxu0 %v221
    %v1281 = vpop.f32.mrf.mxu0
    %v1282 = vadd.f32 %v117, %v1281
    %1283 = vmatmul.f32.gmra.mxu0 %v224
    %v1284 = vpop.f32.mrf.mxu0
    %v1285 = vadd.f32 %v117, %v1284
    %1286 = vmatmul.f32.gmra.mxu0 %v227
    %v1287 = vpop.f32.mrf.mxu0
    %v1288 = vadd.f32 %v117, %v1287
    %1289 = vmatmul.f32.gmra.mxu0 %v230
    %v1290 = vpop.f32.mrf.mxu0
    %v1291 = vadd.f32 %v117, %v1290
    %1292 = vmatmul.f32.gmra.mxu0 %v233
    %v1293 = vpop.f32.mrf.mxu0
    %v1294 = vadd.f32 %v117, %v1293
    %1295 = vmatmul.f32.gmra.mxu0 %v236
    %v1296 = vpop.f32.mrf.mxu0
    %v1297 = vadd.f32 %v117, %v1296
    %1298 = vmatmul.f32.gmra.mxu0 %v239
    %v1299 = vpop.f32.mrf.mxu0
    %v1300 = vadd.f32 %v117, %v1299
    %1301 = vmatmul.f32.gmra.mxu0 %v242
    %v1302 = vpop.f32.mrf.mxu0
    %v1303 = vadd.f32 %v117, %v1302
    %1304 = vmatmul.f32.gmra.mxu0 %v245
    %v1305 = vpop.f32.mrf.mxu0
    %v1306 = vadd.f32 %v117, %v1305
    %1307 = vmatmul.f32.gmra.mxu0 %v248
    %v1308 = vpop.f32.mrf.mxu0
    %v1309 = vadd.f32 %v117, %v1308
    %1310 = vmatmul.f32.gmra.mxu0 %v251
    %v1311 = vpop.f32.mrf.mxu0
    %v1312 = vadd.f32 %v117, %v1311
    %1313 = vmatmul.f32.gmra.mxu0 %v254
    %v1314 = vpop.f32.mrf.mxu0
    %v1315 = vadd.f32 %v117, %v1314
    %1316 = vmatmul.f32.gmra.mxu0 %v257
    %v1317 = vpop.f32.mrf.mxu0
    %v1318 = vadd.f32 %v117, %v1317
    %1319 = vmatmul.f32.gmra.mxu0 %v260
    %v1320 = vpop.f32.mrf.mxu0
    %v1321 = vadd.f32 %v117, %v1320
    %1322 = vmatmul.f32.gmra.mxu0 %v263
    %v1323 = vpop.f32.mrf.mxu0
    %v1324 = vadd.f32 %v117, %v1323
    %1325 = vmatmul.f32.gmra.mxu0 %v266
    %v1326 = vpop.f32.mrf.mxu0
    %v1327 = vadd.f32 %v117, %v1326
    %1328 = vmatmul.f32.gmra.mxu0 %v269
    %v1329 = vpop.f32.mrf.mxu0
    %v1330 = vadd.f32 %v117, %v1329
    %1331 = vmatmul.f32.gmra.mxu0 %v272
    %v1332 = vpop.f32.mrf.mxu0
    %v1333 = vadd.f32 %v117, %v1332
    %1334 = vmatmul.f32.gmra.mxu0 %v275
    %v1335 = vpop.f32.mrf.mxu0
    %v1336 = vadd.f32 %v117, %v1335
    %1337 = vmatmul.f32.gmra.mxu0 %v278
    %v1338 = vpop.f32.mrf.mxu0
    %v1339 = vadd.f32 %v117, %v1338
    %1340 = vmatmul.f32.gmra.mxu0 %v281
    %v1341 = vpop.f32.mrf.mxu0
    %v1342 = vadd.f32 %v117, %v1341
    %1343 = vmatmul.f32.gmra.mxu0 %v284
    %v1344 = vpop.f32.mrf.mxu0
    %v1345 = vadd.f32 %v117, %v1344
    %1346 = vmatmul.f32.gmra.mxu0 %v287
    %v1347 = vpop.f32.mrf.mxu0
    %v1348 = vadd.f32 %v117, %v1347
    %1349 = vmatmul.f32.gmra.mxu0 %v290
    %v1350 = vpop.f32.mrf.mxu0
    %v1351 = vadd.f32 %v117, %v1350
    %1352 = vmatmul.f32.gmra.mxu0 %v293
    %v1353 = vpop.f32.mrf.mxu0
    %v1354 = vadd.f32 %v117, %v1353
    %1355 = vmatmul.f32.gmra.mxu0 %v296
    %v1356 = vpop.f32.mrf.mxu0
    %v1357 = vadd.f32 %v117, %v1356
    %1358 = vmatmul.f32.gmra.mxu0 %v299
    %v1359 = vpop.f32.mrf.mxu0
    %v1360 = vadd.f32 %v117, %v1359
    %1361 = vmatmul.f32.gmra.mxu0 %v302
    %v1362 = vpop.f32.mrf.mxu0
    %v1363 = vadd.f32 %v117, %v1362
    %1364 = vmatmul.f32.gmra.mxu0 %v305
    %v1365 = vpop.f32.mrf.mxu0
    %v1366 = vadd.f32 %v117, %v1365
    %1367 = vmatmul.f32.gmra.mxu0 %v308
    %v1368 = vpop.f32.mrf.mxu0
    %v1369 = vadd.f32 %v117, %v1368
    %1370 = vmatmul.f32.gmra.mxu0 %v311
    %v1371 = vpop.f32.mrf.mxu0
    %v1372 = vadd.f32 %v117, %v1371
    %1373 = vmatmul.f32.gmra.mxu0 %v314
    %v1374 = vpop.f32.mrf.mxu0
    %v1375 = vadd.f32 %v117, %v1374
    %1376 = vdwg.mxu0
    %v1377 = vmax.f32 %v350, 0.0
    %v1378 = vmax.f32 %v559, 0.0
    %v1379 = vmax.f32 %v768, 0.0
    %v1380 = vmax.f32 %v977, 0.0
    %v1381 = vmax.f32 %v1186, 0.0
    %v1382 = vmax.f32 %v353, 0.0
    %v1383 = vmax.f32 %v562, 0.0
    %v1384 = vmax.f32 %v771, 0.0
    %v1385 = vmax.f32 %v980, 0.0
    %v1386 = vmax.f32 %v1189, 0.0
    %v1387 = vmax.f32 %v356, 0.0
    %v1388 = vmax.f32 %v565, 0.0
    %v1389 = vmax.f32 %v774, 0.0
    %v1390 = vmax.f32 %v983, 0.0
    %v1391 = vmax.f32 %v1192, 0.0
    %v1392 = vmax.f32 %v359, 0.0
    %v1393 = vmax.f32 %v568, 0.0
    %v1394 = vmax.f32 %v777, 0.0
    %v1395 = vmax.f32 %v986, 0.0
    %v1396 = vmax.f32 %v1195, 0.0
    %v1397 = vmax.f32 %v362, 0.0
    %v1398 = vmax.f32 %v571, 0.0
    %v1399 = vmax.f32 %v780, 0.0
    %v1400 = vmax.f32 %v989, 0.0
    %v1401 = vmax.f32 %v1198, 0.0
    %v1402 = vmax.f32 %v365, 0.0
    %v1403 = vmax.f32 %v574, 0.0
    %v1404 = vmax.f32 %v783, 0.0
    %v1405 = vmax.f32 %v992, 0.0
    %v1406 = vmax.f32 %v1201, 0.0
    %v1407 = vmax.f32 %v368, 0.0
    %v1408 = vmax.f32 %v577, 0.0
    %v1409 = vmax.f32 %v786, 0.0
    %v1410 = vmax.f32 %v995, 0.0
    %v1411 = vmax.f32 %v1204, 0.0
    %v1412 = vmax.f32 %v371, 0.0
    %v1413 = vmax.f32 %v580, 0.0
    %v1414 = vmax.f32 %v789, 0.0
    %v1415 = vmax.f32 %v998, 0.0
    %v1416 = vmax.f32 %v1207, 0.0
    %v1417 = vmax.f32 %v374, 0.0
    %v1418 = vmax.f32 %v583, 0.0
    %v1419 = vmax.f32 %v792, 0.0
    %v1420 = vmax.f32 %v1001, 0.0
    %v1421 = vmax.f32 %v1210, 0.0
    %v1422 = vmax.f32 %v377, 0.0
    %v1423 = vmax.f32 %v586, 0.0
    %v1424 = vmax.f32 %v795, 0.0
    %v1425 = vmax.f32 %v1004, 0.0
    %v1426 = vmax.f32 %v1213, 0.0
    %v1427 = vmax.f32 %v380, 0.0
    %v1428 = vmax.f32 %v589, 0.0
    %v1429 = vmax.f32 %v798, 0.0
    %v1430 = vmax.f32 %v1007, 0.0
    %v1431 = vmax.f32 %v1216, 0.0
    %v1432 = vmax.f32 %v383, 0.0
    %v1433 = vmax.f32 %v592, 0.0
    %v1434 = vmax.f32 %v801, 0.0
    %v1435 = vmax.f32 %v1010, 0.0
    %v1436 = vmax.f32 %v1219, 0.0
    %v1437 = vmax.f32 %v386, 0.0
    %v1438 = vmax.f32 %v595, 0.0
    %v1439 = vmax.f32 %v804, 0.0
    %v1440 = vmax.f32 %v1013, 0.0
    %v1441 = vmax.f32 %v1222, 0.0
    %v1442 = vmax.f32 %v389, 0.0
    %v1443 = vmax.f32 %v598, 0.0
    %v1444 = vmax.f32 %v807, 0.0
    %v1445 = vmax.f32 %v1016, 0.0
    %v1446 = vmax.f32 %v1225, 0.0
    %v1447 = vmax.f32 %v392, 0.0
    %v1448 = vmax.f32 %v601, 0.0
    %v1449 = vmax.f32 %v810, 0.0
    %v1450 = vmax.f32 %v1019, 0.0
    %v1451 = vmax.f32 %v1228, 0.0
    %v1452 = vmax.f32 %v395, 0.0
    %v1453 = vmax.f32 %v604, 0.0
    %v1454 = vmax.f32 %v813, 0.0
    %v1455 = vmax.f32 %v1022, 0.0
    %v1456 = vmax.f32 %v1231, 0.0
    %v1457 = vmax.f32 %v398, 0.0
    %v1458 = vmax.f32 %v607, 0.0
    %v1459 = vmax.f32 %v816, 0.0
    %v1460 = vmax.f32 %v1025, 0.0
    %v1461 = vmax.f32 %v1234, 0.0
    %v1462 = vmax.f32 %v401, 0.0
    %v1463 = vmax.f32 %v610, 0.0
    %v1464 = vmax.f32 %v819, 0.0
    %v1465 = vmax.f32 %v1028, 0.0
    %v1466 = vmax.f32 %v1237, 0.0
    %v1467 = vmax.f32 %v404, 0.0
    %v1468 = vmax.f32 %v613, 0.0
    %v1469 = vmax.f32 %v822, 0.0
    %v1470 = vmax.f32 %v1031, 0.0
    %v1471 = vmax.f32 %v1240, 0.0
    %v1472 = vmax.f32 %v407, 0.0
    %v1473 = vmax.f32 %v616, 0.0
    %v1474 = vmax.f32 %v825, 0.0
    %v1475 = vmax.f32 %v1034, 0.0
    %v1476 = vmax.f32 %v1243, 0.0
    %v1477 = vmax.f32 %v410, 0.0
    %v1478 = vmax.f32 %v619, 0.0
    %v1479 = vmax.f32 %v828, 0.0
    %v1480 = vmax.f32 %v1037, 0.0
    %v1481 = vmax.f32 %v1246, 0.0
    %v1482 = vmax.f32 %v413, 0.0
    %v1483 = vmax.f32 %v622, 0.0
    %v1484 = vmax.f32 %v831, 0.0
    %v1485 = vmax.f32 %v1040, 0.0
    %v1486 = vmax.f32 %v1249, 0.0
    %v1487 = vmax.f32 %v416, 0.0
    %v1488 = vmax.f32 %v625, 0.0
    %v1489 = vmax.f32 %v834, 0.0
    %v1490 = vmax.f32 %v1043, 0.0
    %v1491 = vmax.f32 %v1252, 0.0
    %v1492 = vmax.f32 %v419, 0.0
    %v1493 = vmax.f32 %v628, 0.0
    %v1494 = vmax.f32 %v837, 0.0
    %v1495 = vmax.f32 %v1046, 0.0
    %v1496 = vmax.f32 %v1255, 0.0
    %v1497 = vmax.f32 %v422, 0.0
    %v1498 = vmax.f32 %v631, 0.0
    %v1499 = vmax.f32 %v840, 0.0
    %v1500 = vmax.f32 %v1049, 0.0
    %v1501 = vmax.f32 %v1258, 0.0
    %v1502 = vmax.f32 %v425, 0.0
    %v1503 = vmax.f32 %v634, 0.0
    %v1504 = vmax.f32 %v843, 0.0
    %v1505 = vmax.f32 %v1052, 0.0
    %v1506 = vmax.f32 %v1261, 0.0
    %v1507 = vmax.f32 %v428, 0.0
    %v1508 = vmax.f32 %v637, 0.0
    %v1509 = vmax.f32 %v846, 0.0
    %v1510 = vmax.f32 %v1055, 0.0
    %v1511 = vmax.f32 %v1264, 0.0
    %v1512 = vmax.f32 %v431, 0.0
    %v1513 = vmax.f32 %v640, 0.0
    %v1514 = vmax.f32 %v849, 0.0
    %v1515 = vmax.f32 %v1058, 0.0
    %v1516 = vmax.f32 %v1267, 0.0
    %v1517 = vmax.f32 %v434, 0.0
    %v1518 = vmax.f32 %v643, 0.0
    %v1519 = vmax.f32 %v852, 0.0
    %v1520 = vmax.f32 %v1061, 0.0
    %v1521 = vmax.f32 %v1270, 0.0
    %v1522 = vmax.f32 %v437, 0.0
    %v1523 = vmax.f32 %v646, 0.0
    %v1524 = vmax.f32 %v855, 0.0
    %v1525 = vmax.f32 %v1064, 0.0
    %v1526 = vmax.f32 %v1273, 0.0
    %v1527 = vmax.f32 %v440, 0.0
    %v1528 = vmax.f32 %v649, 0.0
    %v1529 = vmax.f32 %v858, 0.0
    %v1530 = vmax.f32 %v1067, 0.0
    %v1531 = vmax.f32 %v1276, 0.0
    %v1532 = vmax.f32 %v443, 0.0
    %v1533 = vmax.f32 %v652, 0.0
    %v1534 = vmax.f32 %v861, 0.0
    %v1535 = vmax.f32 %v1070, 0.0
    %v1536 = vmax.f32 %v1279, 0.0
    %v1537 = vmax.f32 %v446, 0.0
    %v1538 = vmax.f32 %v655, 0.0
    %v1539 = vmax.f32 %v864, 0.0
    %v1540 = vmax.f32 %v1073, 0.0
    %v1541 = vmax.f32 %v1282, 0.0
    %v1542 = vmax.f32 %v449, 0.0
    %v1543 = vmax.f32 %v658, 0.0
    %v1544 = vmax.f32 %v867, 0.0
    %v1545 = vmax.f32 %v1076, 0.0
    %v1546 = vmax.f32 %v1285, 0.0
    %v1547 = vmax.f32 %v452, 0.0
    %v1548 = vmax.f32 %v661, 0.0
    %v1549 = vmax.f32 %v870, 0.0
    %v1550 = vmax.f32 %v1079, 0.0
    %v1551 = vmax.f32 %v1288, 0.0
    %v1552 = vmax.f32 %v455, 0.0
    %v1553 = vmax.f32 %v664, 0.0
    %v1554 = vmax.f32 %v873, 0.0
    %v1555 = vmax.f32 %v1082, 0.0
    %v1556 = vmax.f32 %v1291, 0.0
    %v1557 = vmax.f32 %v458, 0.0
    %v1558 = vmax.f32 %v667, 0.0
    %v1559 = vmax.f32 %v876, 0.0
    %v1560 = vmax.f32 %v1085, 0.0
    %v1561 = vmax.f32 %v1294, 0.0
    %v1562 = vmax.f32 %v461, 0.0
    %v1563 = vmax.f32 %v670, 0.0
    %v1564 = vmax.f32 %v879, 0.0
    %v1565 = vmax.f32 %v1088, 0.0
    %v1566 = vmax.f32 %v1297, 0.0
    %v1567 = vmax.f32 %v464, 0.0
    %v1568 = vmax.f32 %v673, 0.0
    %v1569 = vmax.f32 %v882, 0.0
    %v1570 = vmax.f32 %v1091, 0.0
    %v1571 = vmax.f32 %v1300, 0.0
    %v1572 = vmax.f32 %v467, 0.0
    %v1573 = vmax.f32 %v676, 0.0
    %v1574 = vmax.f32 %v885, 0.0
    %v1575 = vmax.f32 %v1094, 0.0
    %v1576 = vmax.f32 %v1303, 0.0
    %v1577 = vmax.f32 %v470, 0.0
    %v1578 = vmax.f32 %v679, 0.0
    %v1579 = vmax.f32 %v888, 0.0
    %v1580 = vmax.f32 %v1097, 0.0
    %v1581 = vmax.f32 %v1306, 0.0
    %v1582 = vmax.f32 %v473, 0.0
    %v1583 = vmax.f32 %v682, 0.0
    %v1584 = vmax.f32 %v891, 0.0
    %v1585 = vmax.f32 %v1100, 0.0
    %v1586 = vmax.f32 %v1309, 0.0
    %v1587 = vmax.f32 %v476, 0.0
    %v1588 = vmax.f32 %v685, 0.0
    %v1589 = vmax.f32 %v894, 0.0
    %v1590 = vmax.f32 %v1103, 0.0
    %v1591 = vmax.f32 %v1312, 0.0
    %v1592 = vmax.f32 %v479, 0.0
    %v1593 = vmax.f32 %v688, 0.0
    %v1594 = vmax.f32 %v897, 0.0
    %v1595 = vmax.f32 %v1106, 0.0
    %v1596 = vmax.f32 %v1315, 0.0
    %v1597 = vmax.f32 %v482, 0.0
    %v1598 = vmax.f32 %v691, 0.0
    %v1599 = vmax.f32 %v900, 0.0
    %v1600 = vmax.f32 %v1109, 0.0
    %v1601 = vmax.f32 %v1318, 0.0
    %v1602 = vmax.f32 %v485, 0.0
    %v1603 = vmax.f32 %v694, 0.0
    %v1604 = vmax.f32 %v903, 0.0
    %v1605 = vmax.f32 %v1112, 0.0
    %v1606 = vmax.f32 %v1321, 0.0
    %v1607 = vmax.f32 %v488, 0.0
    %v1608 = vmax.f32 %v697, 0.0
    %v1609 = vmax.f32 %v906, 0.0
    %v1610 = vmax.f32 %v1115, 0.0
    %v1611 = vmax.f32 %v1324, 0.0
    %v1612 = vmax.f32 %v491, 0.0
    %v1613 = vmax.f32 %v700, 0.0
    %v1614 = vmax.f32 %v909, 0.0
    %v1615 = vmax.f32 %v1118, 0.0
    %v1616 = vmax.f32 %v1327, 0.0
    %v1617 = vmax.f32 %v494, 0.0
    %v1618 = vmax.f32 %v703, 0.0
    %v1619 = vmax.f32 %v912, 0.0
    %v1620 = vmax.f32 %v1121, 0.0
    %v1621 = vmax.f32 %v1330, 0.0
    %v1622 = vmax.f32 %v497, 0.0
    %v1623 = vmax.f32 %v706, 0.0
    %v1624 = vmax.f32 %v915, 0.0
    %v1625 = vmax.f32 %v1124, 0.0
    %v1626 = vmax.f32 %v1333, 0.0
    %v1627 = vmax.f32 %v500, 0.0
    %v1628 = vmax.f32 %v709, 0.0
    %v1629 = vmax.f32 %v918, 0.0
    %v1630 = vmax.f32 %v1127, 0.0
    %v1631 = vmax.f32 %v1336, 0.0
    %v1632 = vmax.f32 %v503, 0.0
    %v1633 = vmax.f32 %v712, 0.0
    %v1634 = vmax.f32 %v921, 0.0
    %v1635 = vmax.f32 %v1130, 0.0
    %v1636 = vmax.f32 %v1339, 0.0
    %v1637 = vmax.f32 %v506, 0.0
    %v1638 = vmax.f32 %v715, 0.0
    %v1639 = vmax.f32 %v924, 0.0
    %v1640 = vmax.f32 %v1133, 0.0
    %v1641 = vmax.f32 %v1342, 0.0
    %v1642 = vmax.f32 %v509, 0.0
    %v1643 = vmax.f32 %v718, 0.0
    %v1644 = vmax.f32 %v927, 0.0
    %v1645 = vmax.f32 %v1136, 0.0
    %v1646 = vmax.f32 %v1345, 0.0
    %v1647 = vmax.f32 %v512, 0.0
    %v1648 = vmax.f32 %v721, 0.0
    %v1649 = vmax.f32 %v930, 0.0
    %v1650 = vmax.f32 %v1139, 0.0
    %v1651 = vmax.f32 %v1348, 0.0
    %v1652 = vmax.f32 %v515, 0.0
    %v1653 = vmax.f32 %v724, 0.0
    %v1654 = vmax.f32 %v933, 0.0
    %v1655 = vmax.f32 %v1142, 0.0
    %v1656 = vmax.f32 %v1351, 0.0
    %v1657 = vmax.f32 %v518, 0.0
    %v1658 = vmax.f32 %v727, 0.0
    %v1659 = vmax.f32 %v936, 0.0
    %v1660 = vmax.f32 %v1145, 0.0
    %v1661 = vmax.f32 %v1354, 0.0
    %v1662 = vmax.f32 %v521, 0.0
    %v1663 = vmax.f32 %v730, 0.0
    %v1664 = vmax.f32 %v939, 0.0
    %v1665 = vmax.f32 %v1148, 0.0
    %v1666 = vmax.f32 %v1357, 0.0
    %v1667 = vmax.f32 %v524, 0.0
    %v1668 = vmax.f32 %v733, 0.0
    %v1669 = vmax.f32 %v942, 0.0
    %v1670 = vmax.f32 %v1151, 0.0
    %v1671 = vmax.f32 %v1360, 0.0
    %v1672 = vmax.f32 %v527, 0.0
    %v1673 = vmax.f32 %v736, 0.0
    %v1674 = vmax.f32 %v945, 0.0
    %v1675 = vmax.f32 %v1154, 0.0
    %v1676 = vmax.f32 %v1363, 0.0
    %v1677 = vmax.f32 %v530, 0.0
    %v1678 = vmax.f32 %v739, 0.0
    %v1679 = vmax.f32 %v948, 0.0
    %v1680 = vmax.f32 %v1157, 0.0
    %v1681 = vmax.f32 %v1366, 0.0
    %v1682 = vmax.f32 %v533, 0.0
    %v1683 = vmax.f32 %v742, 0.0
    %v1684 = vmax.f32 %v951, 0.0
    %v1685 = vmax.f32 %v1160, 0.0
    %v1686 = vmax.f32 %v1369, 0.0
    %v1687 = vmax.f32 %v536, 0.0
    %v1688 = vmax.f32 %v745, 0.0
    %v1689 = vmax.f32 %v954, 0.0
    %v1690 = vmax.f32 %v1163, 0.0
    %v1691 = vmax.f32 %v1372, 0.0
    %v1692 = vmax.f32 %v539, 0.0
    %v1693 = vmax.f32 %v748, 0.0
    %v1694 = vmax.f32 %v957, 0.0
    %v1695 = vmax.f32 %v1166, 0.0
    %v1696 = vmax.f32 %v1375, 0.0
    %v1697 = vadd.f32 %v1377, %v1382
    %v1698 = vadd.f32 %v1697, %v1387
    %v1699 = vadd.f32 %v1698, %v1392
    %v1700 = vadd.f32 %v1699, %v1397
    %v1701 = vadd.f32 %v1700, %v1402
    %v1702 = vadd.f32 %v1701, %v1407
    %v1703 = vadd.f32 %v1702, %v1412
    %v1704 = vadd.f32 %v1703, %v1417
    %v1705 = vadd.f32 %v1704, %v1422
    %v1706 = vadd.f32 %v1705, %v1427
    %v1707 = vadd.f32 %v1706, %v1432
    %v1708 = vadd.f32 %v1707, %v1437
    %v1709 = vadd.f32 %v1708, %v1442
    %v1710 = vadd.f32 %v1709, %v1447
    %v1711 = vadd.f32 %v1710, %v1452
    %v1712 = vadd.f32 %v1711, %v1457
    %v1713 = vadd.f32 %v1712, %v1462
    %v1714 = vadd.f32 %v1713, %v1467
    %v1715 = vadd.f32 %v1714, %v1472
    %v1716 = vadd.f32 %v1715, %v1477
    %v1717 = vadd.f32 %v1716, %v1482
    %v1718 = vadd.f32 %v1717, %v1487
    %v1719 = vadd.f32 %v1718, %v1492
    %v1720 = vadd.f32 %v1719, %v1497
    %v1721 = vadd.f32 %v1720, %v1502
    %v1722 = vadd.f32 %v1721, %v1507
    %v1723 = vadd.f32 %v1722, %v1512
    %v1724 = vadd.f32 %v1723, %v1517
    %v1725 = vadd.f32 %v1724, %v1522
    %v1726 = vadd.f32 %v1725, %v1527
    %v1727 = vadd.f32 %v1726, %v1532
    %v1728 = vrot.slane %v1727, 4
    %v1729 = vadd.f32 %v1727, %v1728
    %v1730 = vrot.slane %v1729, 2
    %v1731 = vadd.f32 %v1729, %v1730
    %v1732 = vrot.slane %v1731, 1
    %v1733 = vadd.f32 %v1731, %v1732
    %v1734 = vadd.f32 %v1378, %v1383
    %v1735 = vadd.f32 %v1734, %v1388
    %v1736 = vadd.f32 %v1735, %v1393
    %v1737 = vadd.f32 %v1736, %v1398
    %v1738 = vadd.f32 %v1737, %v1403
    %v1739 = vadd.f32 %v1738, %v1408
    %v1740 = vadd.f32 %v1739, %v1413
    %v1741 = vadd.f32 %v1740, %v1418
    %v1742 = vadd.f32 %v1741, %v1423
    %v1743 = vadd.f32 %v1742, %v1428
    %v1744 = vadd.f32 %v1743, %v1433
    %v1745 = vadd.f32 %v1744, %v1438
    %v1746 = vadd.f32 %v1745, %v1443
    %v1747 = vadd.f32 %v1746, %v1448
    %v1748 = vadd.f32 %v1747, %v1453
    %v1749 = vadd.f32 %v1748, %v1458
    %v1750 = vadd.f32 %v1749, %v1463
    %v1751 = vadd.f32 %v1750, %v1468
    %v1752 = vadd.f32 %v1751, %v1473
    %v1753 = vadd.f32 %v1752, %v1478
    %v1754 = vadd.f32 %v1753, %v1483
    %v1755 = vadd.f32 %v1754, %v1488
    %v1756 = vadd.f32 %v1755, %v1493
    %v1757 = vadd.f32 %v1756, %v1498
    %v1758 = vadd.f32 %v1757, %v1503
    %v1759 = vadd.f32 %v1758, %v1508
    %v1760 = vadd.f32 %v1759, %v1513
    %v1761 = vadd.f32 %v1760, %v1518
    %v1762 = vadd.f32 %v1761, %v1523
    %v1763 = vadd.f32 %v1762, %v1528
    %v1764 = vadd.f32 %v1763, %v1533
    %v1765 = vrot.slane %v1764, 4
    %v1766 = vadd.f32 %v1764, %v1765
    %v1767 = vrot.slane %v1766, 2
    %v1768 = vadd.f32 %v1766, %v1767
    %v1769 = vrot.slane %v1768, 1
    %v1770 = vadd.f32 %v1768, %v1769
    %v1771 = vadd.f32 %v1379, %v1384
    %v1772 = vadd.f32 %v1771, %v1389
    %v1773 = vadd.f32 %v1772, %v1394
    %v1774 = vadd.f32 %v1773, %v1399
    %v1775 = vadd.f32 %v1774, %v1404
    %v1776 = vadd.f32 %v1775, %v1409
    %v1777 = vadd.f32 %v1776, %v1414
    %v1778 = vadd.f32 %v1777, %v1419
    %v1779 = vadd.f32 %v1778, %v1424
    %v1780 = vadd.f32 %v1779, %v1429
    %v1781 = vadd.f32 %v1780, %v1434
    %v1782 = vadd.f32 %v1781, %v1439
    %v1783 = vadd.f32 %v1782, %v1444
    %v1784 = vadd.f32 %v1783, %v1449
    %v1785 = vadd.f32 %v1784, %v1454
    %v1786 = vadd.f32 %v1785, %v1459
    %v1787 = vadd.f32 %v1786, %v1464
    %v1788 = vadd.f32 %v1787, %v1469
    %v1789 = vadd.f32 %v1788, %v1474
    %v1790 = vadd.f32 %v1789, %v1479
    %v1791 = vadd.f32 %v1790, %v1484
    %v1792 = vadd.f32 %v1791, %v1489
    %v1793 = vadd.f32 %v1792, %v1494
    %v1794 = vadd.f32 %v1793, %v1499
    %v1795 = vadd.f32 %v1794, %v1504
    %v1796 = vadd.f32 %v1795, %v1509
    %v1797 = vadd.f32 %v1796, %v1514
    %v1798 = vadd.f32 %v1797, %v1519
    %v1799 = vadd.f32 %v1798, %v1524
    %v1800 = vadd.f32 %v1799, %v1529
    %v1801 = vadd.f32 %v1800, %v1534
    %v1802 = vrot.slane %v1801, 4
    %v1803 = vadd.f32 %v1801, %v1802
    %v1804 = vrot.slane %v1803, 2
    %v1805 = vadd.f32 %v1803, %v1804
    %v1806 = vrot.slane %v1805, 1
    %v1807 = vadd.f32 %v1805, %v1806
    %v1808 = vadd.f32 %v1380, %v1385
    %v1809 = vadd.f32 %v1808, %v1390
    %v1810 = vadd.f32 %v1809, %v1395
    %v1811 = vadd.f32 %v1810, %v1400
    %v1812 = vadd.f32 %v1811, %v1405
    %v1813 = vadd.f32 %v1812, %v1410
    %v1814 = vadd.f32 %v1813, %v1415
    %v1815 = vadd.f32 %v1814, %v1420
    %v1816 = vadd.f32 %v1815, %v1425
    %v1817 = vadd.f32 %v1816, %v1430
    %v1818 = vadd.f32 %v1817, %v1435
    %v1819 = vadd.f32 %v1818, %v1440
    %v1820 = vadd.f32 %v1819, %v1445
    %v1821 = vadd.f32 %v1820, %v1450
    %v1822 = vadd.f32 %v1821, %v1455
    %v1823 = vadd.f32 %v1822, %v1460
    %v1824 = vadd.f32 %v1823, %v1465
    %v1825 = vadd.f32 %v1824, %v1470
    %v1826 = vadd.f32 %v1825, %v1475
    %v1827 = vadd.f32 %v1826, %v1480
    %v1828 = vadd.f32 %v1827, %v1485
    %v1829 = vadd.f32 %v1828, %v1490
    %v1830 = vadd.f32 %v1829, %v1495
    %v1831 = vadd.f32 %v1830, %v1500
    %v1832 = vadd.f32 %v1831, %v1505
    %v1833 = vadd.f32 %v1832, %v1510
    %v1834 = vadd.f32 %v1833, %v1515
    %v1835 = vadd.f32 %v1834, %v1520
    %v1836 = vadd.f32 %v1835, %v1525
    %v1837 = vadd.f32 %v1836, %v1530
    %v1838 = vadd.f32 %v1837, %v1535
    %v1839 = vrot.slane %v1838, 4
    %v1840 = vadd.f32 %v1838, %v1839
    %v1841 = vrot.slane %v1840, 2
    %v1842 = vadd.f32 %v1840, %v1841
    %v1843 = vrot.slane %v1842, 1
    %v1844 = vadd.f32 %v1842, %v1843
    %vm1845 = vcmask 523264
    %v1846 = vsel %vm1845, %v1381, 0.0
    %v1847 = vsel %vm1845, %v1386, 0.0
    %v1848 = vadd.f32 %v1846, %v1847
    %v1849 = vsel %vm1845, %v1391, 0.0
    %v1850 = vadd.f32 %v1848, %v1849
    %v1851 = vsel %vm1845, %v1396, 0.0
    %v1852 = vadd.f32 %v1850, %v1851
    %v1853 = vsel %vm1845, %v1401, 0.0
    %v1854 = vadd.f32 %v1852, %v1853
    %v1855 = vsel %vm1845, %v1406, 0.0
    %v1856 = vadd.f32 %v1854, %v1855
    %v1857 = vsel %vm1845, %v1411, 0.0
    %v1858 = vadd.f32 %v1856, %v1857
    %v1859 = vsel %vm1845, %v1416, 0.0
    %v1860 = vadd.f32 %v1858, %v1859
    %v1861 = vsel %vm1845, %v1421, 0.0
    %v1862 = vadd.f32 %v1860, %v1861
    %v1863 = vsel %vm1845, %v1426, 0.0
    %v1864 = vadd.f32 %v1862, %v1863
    %v1865 = vsel %vm1845, %v1431, 0.0
    %v1866 = vadd.f32 %v1864, %v1865
    %v1867 = vsel %vm1845, %v1436, 0.0
    %v1868 = vadd.f32 %v1866, %v1867
    %v1869 = vsel %vm1845, %v1441, 0.0
    %v1870 = vadd.f32 %v1868, %v1869
    %v1871 = vsel %vm1845, %v1446, 0.0
    %v1872 = vadd.f32 %v1870, %v1871
    %v1873 = vsel %vm1845, %v1451, 0.0
    %v1874 = vadd.f32 %v1872, %v1873
    %v1875 = vsel %vm1845, %v1456, 0.0
    %v1876 = vadd.f32 %v1874, %v1875
    %v1877 = vsel %vm1845, %v1461, 0.0
    %v1878 = vadd.f32 %v1876, %v1877
    %v1879 = vsel %vm1845, %v1466, 0.0
    %v1880 = vadd.f32 %v1878, %v1879
    %v1881 = vsel %vm1845, %v1471, 0.0
    %v1882 = vadd.f32 %v1880, %v1881
    %v1883 = vsel %vm1845, %v1476, 0.0
    %v1884 = vadd.f32 %v1882, %v1883
    %v1885 = vsel %vm1845, %v1481, 0.0
    %v1886 = vadd.f32 %v1884, %v1885
    %v1887 = vsel %vm1845, %v1486, 0.0
    %v1888 = vadd.f32 %v1886, %v1887
    %v1889 = vsel %vm1845, %v1491, 0.0
    %v1890 = vadd.f32 %v1888, %v1889
    %v1891 = vsel %vm1845, %v1496, 0.0
    %v1892 = vadd.f32 %v1890, %v1891
    %v1893 = vsel %vm1845, %v1501, 0.0
    %v1894 = vadd.f32 %v1892, %v1893
    %v1895 = vsel %vm1845, %v1506, 0.0
    %v1896 = vadd.f32 %v1894, %v1895
    %v1897 = vsel %vm1845, %v1511, 0.0
    %v1898 = vadd.f32 %v1896, %v1897
    %v1899 = vsel %vm1845, %v1516, 0.0
    %v1900 = vadd.f32 %v1898, %v1899
    %v1901 = vsel %vm1845, %v1521, 0.0
    %v1902 = vadd.f32 %v1900, %v1901
    %v1903 = vsel %vm1845, %v1526, 0.0
    %v1904 = vadd.f32 %v1902, %v1903
    %v1905 = vsel %vm1845, %v1531, 0.0
    %v1906 = vadd.f32 %v1904, %v1905
    %v1907 = vsel %vm1845, %v1536, 0.0
    %v1908 = vadd.f32 %v1906, %v1907
    %v1909 = vrot.slane %v1908, 4
    %v1910 = vadd.f32 %v1908, %v1909
    %v1911 = vrot.slane %v1910, 2
    %v1912 = vadd.f32 %v1910, %v1911
    %v1913 = vrot.slane %v1912, 1
    %v1914 = vadd.f32 %v1912, %v1913
    %v1915 = vadd.f32 %v1537, %v1542
    %v1916 = vadd.f32 %v1915, %v1547
    %v1917 = vadd.f32 %v1916, %v1552
    %v1918 = vadd.f32 %v1917, %v1557
    %v1919 = vadd.f32 %v1918, %v1562
    %v1920 = vadd.f32 %v1919, %v1567
    %v1921 = vadd.f32 %v1920, %v1572
    %v1922 = vadd.f32 %v1921, %v1577
    %v1923 = vadd.f32 %v1922, %v1582
    %v1924 = vadd.f32 %v1923, %v1587
    %v1925 = vadd.f32 %v1924, %v1592
    %v1926 = vadd.f32 %v1925, %v1597
    %v1927 = vadd.f32 %v1926, %v1602
    %v1928 = vadd.f32 %v1927, %v1607
    %v1929 = vadd.f32 %v1928, %v1612
    %v1930 = vadd.f32 %v1929, %v1617
    %v1931 = vadd.f32 %v1930, %v1622
    %v1932 = vadd.f32 %v1931, %v1627
    %v1933 = vadd.f32 %v1932, %v1632
    %v1934 = vadd.f32 %v1933, %v1637
    %v1935 = vadd.f32 %v1934, %v1642
    %v1936 = vadd.f32 %v1935, %v1647
    %v1937 = vadd.f32 %v1936, %v1652
    %v1938 = vadd.f32 %v1937, %v1657
    %v1939 = vadd.f32 %v1938, %v1662
    %v1940 = vadd.f32 %v1939, %v1667
    %v1941 = vadd.f32 %v1940, %v1672
    %v1942 = vadd.f32 %v1941, %v1677
    %v1943 = vadd.f32 %v1942, %v1682
    %v1944 = vadd.f32 %v1943, %v1687
    %v1945 = vadd.f32 %v1944, %v1692
    %v1946 = vrot.slane %v1945, 4
    %v1947 = vadd.f32 %v1945, %v1946
    %v1948 = vrot.slane %v1947, 2
    %v1949 = vadd.f32 %v1947, %v1948
    %v1950 = vrot.slane %v1949, 1
    %v1951 = vadd.f32 %v1949, %v1950
    %v1952 = vadd.f32 %v1538, %v1543
    %v1953 = vadd.f32 %v1952, %v1548
    %v1954 = vadd.f32 %v1953, %v1553
    %v1955 = vadd.f32 %v1954, %v1558
    %v1956 = vadd.f32 %v1955, %v1563
    %v1957 = vadd.f32 %v1956, %v1568
    %v1958 = vadd.f32 %v1957, %v1573
    %v1959 = vadd.f32 %v1958, %v1578
    %v1960 = vadd.f32 %v1959, %v1583
    %v1961 = vadd.f32 %v1960, %v1588
    %v1962 = vadd.f32 %v1961, %v1593
    %v1963 = vadd.f32 %v1962, %v1598
    %v1964 = vadd.f32 %v1963, %v1603
    %v1965 = vadd.f32 %v1964, %v1608
    %v1966 = vadd.f32 %v1965, %v1613
    %v1967 = vadd.f32 %v1966, %v1618
    %v1968 = vadd.f32 %v1967, %v1623
    %v1969 = vadd.f32 %v1968, %v1628
    %v1970 = vadd.f32 %v1969, %v1633
    %v1971 = vadd.f32 %v1970, %v1638
    %v1972 = vadd.f32 %v1971, %v1643
    %v1973 = vadd.f32 %v1972, %v1648
    %v1974 = vadd.f32 %v1973, %v1653
    %v1975 = vadd.f32 %v1974, %v1658
    %v1976 = vadd.f32 %v1975, %v1663
    %v1977 = vadd.f32 %v1976, %v1668
    %v1978 = vadd.f32 %v1977, %v1673
    %v1979 = vadd.f32 %v1978, %v1678
    %v1980 = vadd.f32 %v1979, %v1683
    %v1981 = vadd.f32 %v1980, %v1688
    %v1982 = vadd.f32 %v1981, %v1693
    %v1983 = vrot.slane %v1982, 4
    %v1984 = vadd.f32 %v1982, %v1983
    %v1985 = vrot.slane %v1984, 2
    %v1986 = vadd.f32 %v1984, %v1985
    %v1987 = vrot.slane %v1986, 1
    %v1988 = vadd.f32 %v1986, %v1987
    %v1989 = vadd.f32 %v1539, %v1544
    %v1990 = vadd.f32 %v1989, %v1549
    %v1991 = vadd.f32 %v1990, %v1554
    %v1992 = vadd.f32 %v1991, %v1559
    %v1993 = vadd.f32 %v1992, %v1564
    %v1994 = vadd.f32 %v1993, %v1569
    %v1995 = vadd.f32 %v1994, %v1574
    %v1996 = vadd.f32 %v1995, %v1579
    %v1997 = vadd.f32 %v1996, %v1584
    %v1998 = vadd.f32 %v1997, %v1589
    %v1999 = vadd.f32 %v1998, %v1594
    %v2000 = vadd.f32 %v1999, %v1599
    %v2001 = vadd.f32 %v2000, %v1604
    %v2002 = vadd.f32 %v2001, %v1609
    %v2003 = vadd.f32 %v2002, %v1614
    %v2004 = vadd.f32 %v2003, %v1619
    %v2005 = vadd.f32 %v2004, %v1624
    %v2006 = vadd.f32 %v2005, %v1629
    %v2007 = vadd.f32 %v2006, %v1634
    %v2008 = vadd.f32 %v2007, %v1639
    %v2009 = vadd.f32 %v2008, %v1644
    %v2010 = vadd.f32 %v2009, %v1649
    %v2011 = vadd.f32 %v2010, %v1654
    %v2012 = vadd.f32 %v2011, %v1659
    %v2013 = vadd.f32 %v2012, %v1664
    %v2014 = vadd.f32 %v2013, %v1669
    %v2015 = vadd.f32 %v2014, %v1674
    %v2016 = vadd.f32 %v2015, %v1679
    %v2017 = vadd.f32 %v2016, %v1684
    %v2018 = vadd.f32 %v2017, %v1689
    %v2019 = vadd.f32 %v2018, %v1694
    %v2020 = vrot.slane %v2019, 4
    %v2021 = vadd.f32 %v2019, %v2020
    %v2022 = vrot.slane %v2021, 2
    %v2023 = vadd.f32 %v2021, %v2022
    %v2024 = vrot.slane %v2023, 1
    %v2025 = vadd.f32 %v2023, %v2024
    %v2026 = vadd.f32 %v1540, %v1545
    %v2027 = vadd.f32 %v2026, %v1550
    %v2028 = vadd.f32 %v2027, %v1555
    %v2029 = vadd.f32 %v2028, %v1560
    %v2030 = vadd.f32 %v2029, %v1565
    %v2031 = vadd.f32 %v2030, %v1570
    %v2032 = vadd.f32 %v2031, %v1575
    %v2033 = vadd.f32 %v2032, %v1580
    %v2034 = vadd.f32 %v2033, %v1585
    %v2035 = vadd.f32 %v2034, %v1590
    %v2036 = vadd.f32 %v2035, %v1595
    %v2037 = vadd.f32 %v2036, %v1600
    %v2038 = vadd.f32 %v2037, %v1605
    %v2039 = vadd.f32 %v2038, %v1610
    %v2040 = vadd.f32 %v2039, %v1615
    %v2041 = vadd.f32 %v2040, %v1620
    %v2042 = vadd.f32 %v2041, %v1625
    %v2043 = vadd.f32 %v2042, %v1630
    %v2044 = vadd.f32 %v2043, %v1635
    %v2045 = vadd.f32 %v2044, %v1640
    %v2046 = vadd.f32 %v2045, %v1645
    %v2047 = vadd.f32 %v2046, %v1650
    %v2048 = vadd.f32 %v2047, %v1655
    %v2049 = vadd.f32 %v2048, %v1660
    %v2050 = vadd.f32 %v2049, %v1665
    %v2051 = vadd.f32 %v2050, %v1670
    %v2052 = vadd.f32 %v2051, %v1675
    %v2053 = vadd.f32 %v2052, %v1680
    %v2054 = vadd.f32 %v2053, %v1685
    %v2055 = vadd.f32 %v2054, %v1690
    %v2056 = vadd.f32 %v2055, %v1695
    %v2057 = vrot.slane %v2056, 4
    %v2058 = vadd.f32 %v2056, %v2057
    %v2059 = vrot.slane %v2058, 2
    %v2060 = vadd.f32 %v2058, %v2059
    %v2061 = vrot.slane %v2060, 1
    %v2062 = vadd.f32 %v2060, %v2061
    %v2063 = vsel %vm1845, %v1541, 0.0
    %v2064 = vsel %vm1845, %v1546, 0.0
    %v2065 = vadd.f32 %v2063, %v2064
    %v2066 = vsel %vm1845, %v1551, 0.0
    %v2067 = vadd.f32 %v2065, %v2066
    %v2068 = vsel %vm1845, %v1556, 0.0
    %v2069 = vadd.f32 %v2067, %v2068
    %v2070 = vsel %vm1845, %v1561, 0.0
    %v2071 = vadd.f32 %v2069, %v2070
    %v2072 = vsel %vm1845, %v1566, 0.0
    %v2073 = vadd.f32 %v2071, %v2072
    %v2074 = vsel %vm1845, %v1571, 0.0
    %v2075 = vadd.f32 %v2073, %v2074
    %v2076 = vsel %vm1845, %v1576, 0.0
    %v2077 = vadd.f32 %v2075, %v2076
    %v2078 = vsel %vm1845, %v1581, 0.0
    %v2079 = vadd.f32 %v2077, %v2078
    %v2080 = vsel %vm1845, %v1586, 0.0
    %v2081 = vadd.f32 %v2079, %v2080
    %v2082 = vsel %vm1845, %v1591, 0.0
    %v2083 = vadd.f32 %v2081, %v2082
    %v2084 = vsel %vm1845, %v1596, 0.0
    %v2085 = vadd.f32 %v2083, %v2084
    %v2086 = vsel %vm1845, %v1601, 0.0
    %v2087 = vadd.f32 %v2085, %v2086
    %v2088 = vsel %vm1845, %v1606, 0.0
    %v2089 = vadd.f32 %v2087, %v2088
    %v2090 = vsel %vm1845, %v1611, 0.0
    %v2091 = vadd.f32 %v2089, %v2090
    %v2092 = vsel %vm1845, %v1616, 0.0
    %v2093 = vadd.f32 %v2091, %v2092
    %v2094 = vsel %vm1845, %v1621, 0.0
    %v2095 = vadd.f32 %v2093, %v2094
    %v2096 = vsel %vm1845, %v1626, 0.0
    %v2097 = vadd.f32 %v2095, %v2096
    %v2098 = vsel %vm1845, %v1631, 0.0
    %v2099 = vadd.f32 %v2097, %v2098
    %v2100 = vsel %vm1845, %v1636, 0.0
    %v2101 = vadd.f32 %v2099, %v2100
    %v2102 = vsel %vm1845, %v1641, 0.0
    %v2103 = vadd.f32 %v2101, %v2102
    %v2104 = vsel %vm1845, %v1646, 0.0
    %v2105 = vadd.f32 %v2103, %v2104
    %v2106 = vsel %vm1845, %v1651, 0.0
    %v2107 = vadd.f32 %v2105, %v2106
    %v2108 = vsel %vm1845, %v1656, 0.0
    %v2109 = vadd.f32 %v2107, %v2108
    %v2110 = vsel %vm1845, %v1661, 0.0
    %v2111 = vadd.f32 %v2109, %v2110
    %v2112 = vsel %vm1845, %v1666, 0.0
    %v2113 = vadd.f32 %v2111, %v2112
    %v2114 = vsel %vm1845, %v1671, 0.0
    %v2115 = vadd.f32 %v2113, %v2114
    %v2116 = vsel %vm1845, %v1676, 0.0
    %v2117 = vadd.f32 %v2115, %v2116
    %v2118 = vsel %vm1845, %v1681, 0.0
    %v2119 = vadd.f32 %v2117, %v2118
    %v2120 = vsel %vm1845, %v1686, 0.0
    %v2121 = vadd.f32 %v2119, %v2120
    %v2122 = vsel %vm1845, %v1691, 0.0
    %v2123 = vadd.f32 %v2121, %v2122
    %v2124 = vsel %vm1845, %v1696, 0.0
    %v2125 = vadd.f32 %v2123, %v2124
    %v2126 = vrot.slane %v2125, 4
    %v2127 = vadd.f32 %v2125, %v2126
    %v2128 = vrot.slane %v2127, 2
    %v2129 = vadd.f32 %v2127, %v2128
    %v2130 = vrot.slane %v2129, 1
    %v2131 = vadd.f32 %v2129, %v2130
    %v2132 = vrcp.pop 256.0
    %v2133 = vmul.f32 256.0, %v2132
    %v2134 = vsub.f32 1.0, %v2133
    %v2135 = vmul.f32 %v2132, %v2134
    %v2136 = vadd.f32 %v2132, %v2135
    %vm2137 = vweird.f32 %v2132
    %v2138 = vsel %vm2137, %v2132, %v2136
    %v2139 = vmul.f32 %v1733, %v2138
    %v2140 = vmul.f32 %v1770, %v2138
    %v2141 = vmul.f32 %v1807, %v2138
    %v2142 = vmul.f32 %v1844, %v2138
    %v2143 = vmul.f32 %v1914, %v2138
    %v2144 = vmul.f32 %v1951, %v2138
    %v2145 = vmul.f32 %v1988, %v2138
    %v2146 = vmul.f32 %v2025, %v2138
    %v2147 = vmul.f32 %v2062, %v2138
    %v2148 = vmul.f32 %v2131, %v2138
    %v2149 = vld [vmem:[%s3] sm:$0xff]
    %v2150 = vld [vmem:[%s3 + $0x8] sm:$0xff]
    %v2151 = vld [vmem:[%s3 + $0x10] sm:$0xff]
    %v2152 = vld [vmem:[%s3 + $0x18] sm:$0xff]
    %v2153 = vld [vmem:[%s3 + $0x20] sm:$0xff]
    %v2154 = vld [vmem:[%s3 + $0x28] sm:$0xff]
    %v2155 = vld [vmem:[%s3 + $0x30] sm:$0xff]
    %v2156 = vld [vmem:[%s3 + $0x38] sm:$0xff]
    %v2157 = vld [vmem:[%s3 + $0x40] sm:$0xff]
    %v2158 = vld [vmem:[%s3 + $0x48] sm:$0xff]
    %v2159 = vld [vmem:[%s3 + $0x50] sm:$0xff]
    %v2160 = vld [vmem:[%s3 + $0x58] sm:$0xff]
    %v2161 = vld [vmem:[%s3 + $0x60] sm:$0xff]
    %v2162 = vld [vmem:[%s3 + $0x68] sm:$0xff]
    %v2163 = vld [vmem:[%s3 + $0x70] sm:$0xff]
    %v2164 = vld [vmem:[%s3 + $0x78] sm:$0xff]
    %v2165 = vld [vmem:[%s3 + $0x80] sm:$0xff]
    %v2166 = vld [vmem:[%s3 + $0x88] sm:$0xff]
    %v2167 = vld [vmem:[%s3 + $0x90] sm:$0xff]
    %v2168 = vld [vmem:[%s3 + $0x98] sm:$0xff]
    %v2169 = vld [vmem:[%s3 + $0xa0] sm:$0xff]
    %v2170 = vld [vmem:[%s3 + $0xa8] sm:$0xff]
    %v2171 = vld [vmem:[%s3 + $0xb0] sm:$0xff]
    %v2172 = vld [vmem:[%s3 + $0xb8] sm:$0xff]
    %v2173 = vld [vmem:[%s3 + $0xc0] sm:$0xff]
    %v2174 = vld [vmem:[%s3 + $0xc8] sm:$0xff]
    %v2175 = vld [vmem:[%s3 + $0xd0] sm:$0xff]
    %v2176 = vld [vmem:[%s3 + $0xd8] sm:$0xff]
    %v2177 = vld [vmem:[%s3 + $0xe0] sm:$0xff]
    %v2178 = vld [vmem:[%s3 + $0xe8] sm:$0xff]
    %v2179 = vld [vmem:[%s3 + $0xf0] sm:$0xff]
    %v2180 = vld [vmem:[%s3 + $0xf8] sm:$0xff]
    %v2181 = vld [vmem:[%s3 + $0x100] sm:$0xff]
    %v2182 = vld [vmem:[%s3 + $0x108] sm:$0xff]
    %v2183 = vld [vmem:[%s3 + $0x110] sm:$0xff]
    %v2184 = vld [vmem:[%s3 + $0x118] sm:$0xff]
    %v2185 = vld [vmem:[%s3 + $0x120] sm:$0xff]
    %v2186 = vld [vmem:[%s3 + $0x128] sm:$0xff]
    %v2187 = vld [vmem:[%s3 + $0x130] sm:$0xff]
    %v2188 = vld [vmem:[%s3 + $0x138] sm:$0xff]
    %v2189 = vld [vmem:[%s3 + $0x140] sm:$0xff]
    %v2190 = vld [vmem:[%s3 + $0x148] sm:$0xff]
    %v2191 = vld [vmem:[%s3 + $0x150] sm:$0xff]
    %v2192 = vld [vmem:[%s3 + $0x158] sm:$0xff]
    %v2193 = vld [vmem:[%s3 + $0x160] sm:$0xff]
    %v2194 = vld [vmem:[%s3 + $0x168] sm:$0xff]
    %v2195 = vld [vmem:[%s3 + $0x170] sm:$0xff]
    %v2196 = vld [vmem:[%s3 + $0x178] sm:$0xff]
    %v2197 = vld [vmem:[%s3 + $0x180] sm:$0xff]
    %v2198 = vld [vmem:[%s3 + $0x188] sm:$0xff]
    %v2199 = vld [vmem:[%s3 + $0x190] sm:$0xff]
    %v2200 = vld [vmem:[%s3 + $0x198] sm:$0xff]
    %v2201 = vld [vmem:[%s3 + $0x1a0] sm:$0xff]
    %v2202 = vld [vmem:[%s3 + $0x1a8] sm:$0xff]
    %v2203 = vld [vmem:[%s3 + $0x1b0] sm:$0xff]
    %v2204 = vld [vmem:[%s3 + $0x1b8] sm:$0xff]
    %v2205 = vld [vmem:[%s3 + $0x1c0] sm:$0xff]
    %v2206 = vld [vmem:[%s3 + $0x1c8] sm:$0xff]
    %v2207 = vld [vmem:[%s3 + $0x1d0] sm:$0xff]
    %v2208 = vld [vmem:[%s3 + $0x1d8] sm:$0xff]
    %v2209 = vld [vmem:[%s3 + $0x1e0] sm:$0xff]
    %v2210 = vld [vmem:[%s3 + $0x1e8] sm:$0xff]
    %v2211 = vld [vmem:[%s3 + $0x1f0] sm:$0xff]
    %v2212 = vld [vmem:[%s3 + $0x1f8] sm:$0xff]
    %v2213 = vld [vmem:[%s3 + $0x200] sm:$0xff]
    %v2214 = vld [vmem:[%s3 + $0x208] sm:$0xff]
    %v2215 = vld [vmem:[%s3 + $0x210] sm:$0xff]
    %v2216 = vld [vmem:[%s3 + $0x218] sm:$0xff]
    %v2217 = vld [vmem:[%s3 + $0x220] sm:$0xff]
    %v2218 = vld [vmem:[%s3 + $0x228] sm:$0xff]
    %v2219 = vld [vmem:[%s3 + $0x230] sm:$0xff]
    %v2220 = vld [vmem:[%s3 + $0x238] sm:$0xff]
    %v2221 = vld [vmem:[%s3 + $0x240] sm:$0xff]
    %v2222 = vld [vmem:[%s3 + $0x248] sm:$0xff]
    %v2223 = vld [vmem:[%s3 + $0x250] sm:$0xff]
    %v2224 = vld [vmem:[%s3 + $0x258] sm:$0xff]
    %v2225 = vld [vmem:[%s3 + $0x260] sm:$0xff]
    %v2226 = vld [vmem:[%s3 + $0x268] sm:$0xff]
    %v2227 = vld [vmem:[%s3 + $0x270] sm:$0xff]
    %v2228 = vld [vmem:[%s3 + $0x278] sm:$0xff]
    %v2229 = vld [vmem:[%s3 + $0x280] sm:$0xff]
    %v2230 = vld [vmem:[%s3 + $0x288] sm:$0xff]
    %v2231 = vld [vmem:[%s3 + $0x290] sm:$0xff]
    %v2232 = vld [vmem:[%s3 + $0x298] sm:$0xff]
    %v2233 = vld [vmem:[%s3 + $0x2a0] sm:$0xff]
    %v2234 = vld [vmem:[%s3 + $0x2a8] sm:$0xff]
    %v2235 = vld [vmem:[%s3 + $0x2b0] sm:$0xff]
    %v2236 = vld [vmem:[%s3 + $0x2b8] sm:$0xff]
    %v2237 = vld [vmem:[%s3 + $0x2c0] sm:$0xff]
    %v2238 = vld [vmem:[%s3 + $0x2c8] sm:$0xff]
    %v2239 = vld [vmem:[%s3 + $0x2d0] sm:$0xff]
    %v2240 = vld [vmem:[%s3 + $0x2d8] sm:$0xff]
    %v2241 = vld [vmem:[%s3 + $0x2e0] sm:$0xff]
    %v2242 = vld [vmem:[%s3 + $0x2e8] sm:$0xff]
    %v2243 = vld [vmem:[%s3 + $0x2f0] sm:$0xff]
    %v2244 = vld [vmem:[%s3 + $0x2f8] sm:$0xff]
    %v2245 = vld [vmem:[%s3 + $0x300] sm:$0xff]
    %v2246 = vld [vmem:[%s3 + $0x308] sm:$0xff]
    %v2247 = vld [vmem:[%s3 + $0x310] sm:$0xff]
    %v2248 = vld [vmem:[%s3 + $0x318] sm:$0xff]
    %v2249 = vld [vmem:[%s3 + $0x320] sm:$0xff]
    %v2250 = vld [vmem:[%s3 + $0x328] sm:$0xff]
    %v2251 = vld [vmem:[%s3 + $0x330] sm:$0xff]
    %v2252 = vld [vmem:[%s3 + $0x338] sm:$0xff]
    %v2253 = vld [vmem:[%s3 + $0x340] sm:$0xff]
    %v2254 = vld [vmem:[%s3 + $0x348] sm:$0xff]
    %v2255 = vld [vmem:[%s3 + $0x350] sm:$0xff]
    %v2256 = vld [vmem:[%s3 + $0x358] sm:$0xff]
    %v2257 = vld [vmem:[%s3 + $0x360] sm:$0xff]
    %v2258 = vld [vmem:[%s3 + $0x368] sm:$0xff]
    %v2259 = vld [vmem:[%s3 + $0x370] sm:$0xff]
    %v2260 = vld [vmem:[%s3 + $0x378] sm:$0xff]
    %v2261 = vld [vmem:[%s3 + $0x380] sm:$0xff]
    %v2262 = vld [vmem:[%s3 + $0x388] sm:$0xff]
    %v2263 = vld [vmem:[%s3 + $0x390] sm:$0xff]
    %v2264 = vld [vmem:[%s3 + $0x398] sm:$0xff]
    %v2265 = vld [vmem:[%s3 + $0x3a0] sm:$0xff]
    %v2266 = vld [vmem:[%s3 + $0x3a8] sm:$0xff]
    %v2267 = vld [vmem:[%s3 + $0x3b0] sm:$0xff]
    %v2268 = vld [vmem:[%s3 + $0x3b8] sm:$0xff]
    %v2269 = vld [vmem:[%s3 + $0x3c0] sm:$0xff]
    %v2270 = vld [vmem:[%s3 + $0x3c8] sm:$0xff]
    %v2271 = vld [vmem:[%s3 + $0x3d0] sm:$0xff]
    %v2272 = vld [vmem:[%s3 + $0x3d8] sm:$0xff]
    %v2273 = vld [vmem:[%s3 + $0x3e0] sm:$0xff]
    %v2274 = vld [vmem:[%s3 + $0x3e8] sm:$0xff]
    %v2275 = vld [vmem:[%s3 + $0x3f0] sm:$0xff]
    %v2276 = vld [vmem:[%s3 + $0x3f8] sm:$0xff]
    %v2277 = vld [vmem:[%s3 + $0x400] sm:$0xff]
    %v2278 = vld [vmem:[%s3 + $0x408] sm:$0xff]
    %v2279 = vld [vmem:[%s3 + $0x410] sm:$0xff]
    %v2280 = vld [vmem:[%s3 + $0x418] sm:$0xff]
    %v2281 = vld [vmem:[%s3 + $0x420] sm:$0xff]
    %v2282 = vld [vmem:[%s3 + $0x428] sm:$0xff]
    %v2283 = vld [vmem:[%s3 + $0x430] sm:$0xff]
    %v2284 = vld [vmem:[%s3 + $0x438] sm:$0xff]
    %v2285 = vld [vmem:[%s3 + $0x440] sm:$0xff]
    %v2286 = vld [vmem:[%s3 + $0x448] sm:$0xff]
    %v2287 = vld [vmem:[%s3 + $0x450] sm:$0xff]
    %v2288 = vld [vmem:[%s3 + $0x458] sm:$0xff]
    %v2289 = vld [vmem:[%s3 + $0x460] sm:$0xff]
    %v2290 = vld [vmem:[%s3 + $0x468] sm:$0xff]
    %v2291 = vld [vmem:[%s3 + $0x470] sm:$0xff]
    %v2292 = vld [vmem:[%s3 + $0x478] sm:$0xff]
    %v2293 = vld [vmem:[%s4] sm:$0x3]
    %v2295 = vperm.slane %v2293, 0
    %v2296 = vperm.slane %v2293, 1
    %vm2309 = vcmask 1041409
    %v2310 = vsel %vm2309, %v2144, %v2139
    %v2311 = vsel %vm2309, %v2145, %v2140
    %v2312 = vsel %vm2309, %v2146, %v2141
    %v2313 = vsel %vm2309, %v2147, %v2142
    %v2314 = vsel %vm2309, %v2148, %v2143
    %v2319 = vsel %vm1845, %v2314, 0
    %2321 = vmatpush.msra.mxu0 %v2179
    %2322 = vmatpush.msra.mxu0 %v2177
    %2323 = vmatpush.msra.mxu0 %v2175
    %2324 = vmatpush.msra.mxu0 %v2173
    %2325 = vmatpush.msra.mxu0 %v2171
    %2326 = vmatpush.msra.mxu0 %v2169
    %2327 = vmatpush.msra.mxu0 %v2167
    %2328 = vmatpush.msra.mxu0 %v2165
    %2329 = vmatpush.msra.mxu0 %v2163
    %2330 = vmatpush.msra.mxu0 %v2161
    %2331 = vmatpush.msra.mxu0 %v2159
    %2332 = vmatpush.msra.mxu0 %v2157
    %2333 = vmatpush.msra.mxu0 %v2155
    %2334 = vmatpush.msra.mxu0 %v2153
    %2335 = vmatpush.msra.mxu0 %v2151
    %2336 = vmatpush.msra.mxu0 %v2149
    %2337 = vmatmul.f32.gmra.mxu0 %v2310
    %v2338 = vpop.f32.mrf.mxu0
    %v2339 = vadd.f32 %v2295, %v2338
    %2340 = vdwg.mxu0
    %2341 = vmatpush.msra.mxu0 %v2211
    %2342 = vmatpush.msra.mxu0 %v2209
    %2343 = vmatpush.msra.mxu0 %v2207
    %2344 = vmatpush.msra.mxu0 %v2205
    %2345 = vmatpush.msra.mxu0 %v2203
    %2346 = vmatpush.msra.mxu0 %v2201
    %2347 = vmatpush.msra.mxu0 %v2199
    %2348 = vmatpush.msra.mxu0 %v2197
    %2349 = vmatpush.msra.mxu0 %v2195
    %2350 = vmatpush.msra.mxu0 %v2193
    %2351 = vmatpush.msra.mxu0 %v2191
    %2352 = vmatpush.msra.mxu0 %v2189
    %2353 = vmatpush.msra.mxu0 %v2187
    %2354 = vmatpush.msra.mxu0 %v2185
    %2355 = vmatpush.msra.mxu0 %v2183
    %2356 = vmatpush.msra.mxu0 %v2181
    %2357 = vmatmul.f32.gmra.mxu0 %v2311
    %v2358 = vpop.f32.mrf.mxu0
    %v2359 = vadd.f32 %v2339, %v2358
    %2360 = vdwg.mxu0
    %2361 = vmatpush.msra.mxu0 %v2243
    %2362 = vmatpush.msra.mxu0 %v2241
    %2363 = vmatpush.msra.mxu0 %v2239
    %2364 = vmatpush.msra.mxu0 %v2237
    %2365 = vmatpush.msra.mxu0 %v2235
    %2366 = vmatpush.msra.mxu0 %v2233
    %2367 = vmatpush.msra.mxu0 %v2231
    %2368 = vmatpush.msra.mxu0 %v2229
    %2369 = vmatpush.msra.mxu0 %v2227
    %2370 = vmatpush.msra.mxu0 %v2225
    %2371 = vmatpush.msra.mxu0 %v2223
    %2372 = vmatpush.msra.mxu0 %v2221
    %2373 = vmatpush.msra.mxu0 %v2219
    %2374 = vmatpush.msra.mxu0 %v2217
    %2375 = vmatpush.msra.mxu0 %v2215
    %2376 = vmatpush.msra.mxu0 %v2213
    %2377 = vmatmul.f32.gmra.mxu0 %v2312
    %v2378 = vpop.f32.mrf.mxu0
    %v2379 = vadd.f32 %v2359, %v2378
    %2380 = vdwg.mxu0
    %2381 = vmatpush.msra.mxu0 %v2275
    %2382 = vmatpush.msra.mxu0 %v2273
    %2383 = vmatpush.msra.mxu0 %v2271
    %2384 = vmatpush.msra.mxu0 %v2269
    %2385 = vmatpush.msra.mxu0 %v2267
    %2386 = vmatpush.msra.mxu0 %v2265
    %2387 = vmatpush.msra.mxu0 %v2263
    %2388 = vmatpush.msra.mxu0 %v2261
    %2389 = vmatpush.msra.mxu0 %v2259
    %2390 = vmatpush.msra.mxu0 %v2257
    %2391 = vmatpush.msra.mxu0 %v2255
    %2392 = vmatpush.msra.mxu0 %v2253
    %2393 = vmatpush.msra.mxu0 %v2251
    %2394 = vmatpush.msra.mxu0 %v2249
    %2395 = vmatpush.msra.mxu0 %v2247
    %2396 = vmatpush.msra.mxu0 %v2245
    %2397 = vmatmul.f32.gmra.mxu0 %v2313
    %v2398 = vpop.f32.mrf.mxu0
    %v2399 = vadd.f32 %v2379, %v2398
    %2400 = vdwg.mxu0
    %2401 = vmatpush.msra.mxu0 0.0
    %2402 = vmatpush.msra.mxu0 0.0
    %2403 = vmatpush.msra.mxu0 0.0
    %2404 = vmatpush.msra.mxu0 0.0
    %2405 = vmatpush.msra.mxu0 0.0
    %2406 = vmatpush.msra.mxu0 0.0
    %2407 = vmatpush.msra.mxu0 0.0
    %2408 = vmatpush.msra.mxu0 0.0
    %2409 = vmatpush.msra.mxu0 %v2291
    %2410 = vmatpush.msra.mxu0 %v2289
    %2411 = vmatpush.msra.mxu0 %v2287
    %2412 = vmatpush.msra.mxu0 %v2285
    %2413 = vmatpush.msra.mxu0 %v2283
    %2414 = vmatpush.msra.mxu0 %v2281
    %2415 = vmatpush.msra.mxu0 %v2279
    %2416 = vmatpush.msra.mxu0 %v2277
    %2417 = vmatmul.f32.gmra.mxu0 %v2319
    %v2418 = vpop.f32.mrf.mxu0
    %v2419 = vadd.f32 %v2399, %v2418
    %2420 = vdwg.mxu0
    %2421 = vmatpush.msra.mxu0 %v2180
    %2422 = vmatpush.msra.mxu0 %v2178
    %2423 = vmatpush.msra.mxu0 %v2176
    %2424 = vmatpush.msra.mxu0 %v2174
    %2425 = vmatpush.msra.mxu0 %v2172
    %2426 = vmatpush.msra.mxu0 %v2170
    %2427 = vmatpush.msra.mxu0 %v2168
    %2428 = vmatpush.msra.mxu0 %v2166
    %2429 = vmatpush.msra.mxu0 %v2164
    %2430 = vmatpush.msra.mxu0 %v2162
    %2431 = vmatpush.msra.mxu0 %v2160
    %2432 = vmatpush.msra.mxu0 %v2158
    %2433 = vmatpush.msra.mxu0 %v2156
    %2434 = vmatpush.msra.mxu0 %v2154
    %2435 = vmatpush.msra.mxu0 %v2152
    %2436 = vmatpush.msra.mxu0 %v2150
    %2437 = vmatmul.f32.gmra.mxu0 %v2310
    %v2438 = vpop.f32.mrf.mxu0
    %v2439 = vadd.f32 %v2296, %v2438
    %2440 = vdwg.mxu0
    %2441 = vmatpush.msra.mxu0 %v2212
    %2442 = vmatpush.msra.mxu0 %v2210
    %2443 = vmatpush.msra.mxu0 %v2208
    %2444 = vmatpush.msra.mxu0 %v2206
    %2445 = vmatpush.msra.mxu0 %v2204
    %2446 = vmatpush.msra.mxu0 %v2202
    %2447 = vmatpush.msra.mxu0 %v2200
    %2448 = vmatpush.msra.mxu0 %v2198
    %2449 = vmatpush.msra.mxu0 %v2196
    %2450 = vmatpush.msra.mxu0 %v2194
    %2451 = vmatpush.msra.mxu0 %v2192
    %2452 = vmatpush.msra.mxu0 %v2190
    %2453 = vmatpush.msra.mxu0 %v2188
    %2454 = vmatpush.msra.mxu0 %v2186
    %2455 = vmatpush.msra.mxu0 %v2184
    %2456 = vmatpush.msra.mxu0 %v2182
    %2457 = vmatmul.f32.gmra.mxu0 %v2311
    %v2458 = vpop.f32.mrf.mxu0
    %v2459 = vadd.f32 %v2439, %v2458
    %2460 = vdwg.mxu0
    %2461 = vmatpush.msra.mxu0 %v2244
    %2462 = vmatpush.msra.mxu0 %v2242
    %2463 = vmatpush.msra.mxu0 %v2240
    %2464 = vmatpush.msra.mxu0 %v2238
    %2465 = vmatpush.msra.mxu0 %v2236
    %2466 = vmatpush.msra.mxu0 %v2234
    %2467 = vmatpush.msra.mxu0 %v2232
    %2468 = vmatpush.msra.mxu0 %v2230
    %2469 = vmatpush.msra.mxu0 %v2228
    %2470 = vmatpush.msra.mxu0 %v2226
    %2471 = vmatpush.msra.mxu0 %v2224
    %2472 = vmatpush.msra.mxu0 %v2222
    %2473 = vmatpush.msra.mxu0 %v2220
    %2474 = vmatpush.msra.mxu0 %v2218
    %2475 = vmatpush.msra.mxu0 %v2216
    %2476 = vmatpush.msra.mxu0 %v2214
    %2477 = vmatmul.f32.gmra.mxu0 %v2312
    %v2478 = vpop.f32.mrf.mxu0
    %v2479 = vadd.f32 %v2459, %v2478
    %2480 = vdwg.mxu0
    %2481 = vmatpush.msra.mxu0 %v2276
    %2482 = vmatpush.msra.mxu0 %v2274
    %2483 = vmatpush.msra.mxu0 %v2272
    %2484 = vmatpush.msra.mxu0 %v2270
    %2485 = vmatpush.msra.mxu0 %v2268
    %2486 = vmatpush.msra.mxu0 %v2266
    %2487 = vmatpush.msra.mxu0 %v2264
    %2488 = vmatpush.msra.mxu0 %v2262
    %2489 = vmatpush.msra.mxu0 %v2260
    %2490 = vmatpush.msra.mxu0 %v2258
    %2491 = vmatpush.msra.mxu0 %v2256
    %2492 = vmatpush.msra.mxu0 %v2254
    %2493 = vmatpush.msra.mxu0 %v2252
    %2494 = vmatpush.msra.mxu0 %v2250
    %2495 = vmatpush.msra.mxu0 %v2248
    %2496 = vmatpush.msra.mxu0 %v2246
    %2497 = vmatmul.f32.gmra.mxu0 %v2313
    %v2498 = vpop.f32.mrf.mxu0
    %v2499 = vadd.f32 %v2479, %v2498
    %2500 = vdwg.mxu0
    %2501 = vmatpush.msra.mxu0 0.0
    %2502 = vmatpush.msra.mxu0 0.0
    %2503 = vmatpush.msra.mxu0 0.0
    %2504 = vmatpush.msra.mxu0 0.0
    %2505 = vmatpush.msra.mxu0 0.0
    %2506 = vmatpush.msra.mxu0 0.0
    %2507 = vmatpush.msra.mxu0 0.0
    %2508 = vmatpush.msra.mxu0 0.0
    %2509 = vmatpush.msra.mxu0 %v2292
    %2510 = vmatpush.msra.mxu0 %v2290
    %2511 = vmatpush.msra.mxu0 %v2288
    %2512 = vmatpush.msra.mxu0 %v2286
    %2513 = vmatpush.msra.mxu0 %v2284
    %2514 = vmatpush.msra.mxu0 %v2282
    %2515 = vmatpush.msra.mxu0 %v2280
    %2516 = vmatpush.msra.mxu0 %v2278
    %2517 = vmatmul.f32.gmra.mxu0 %v2319
    %v2518 = vpop.f32.mrf.mxu0
    %v2519 = vadd.f32 %v2499, %v2518
    %2520 = vdwg.mxu0
    %v2521 = vmax.f32 %v2419, 0.0
    %v2522 = vmax.f32 %v2519, 0.0
    %v2523 = vld [vmem:[%s5] sm:$0xff]
    %v2524 = vld [vmem:[%s5 + $0x8] sm:$0xff]
    %v2525 = vld [vmem:[%s5 + $0x10] sm:$0xff]
    %v2526 = vld [vmem:[%s5 + $0x18] sm:$0xff]
    %v2527 = vld [vmem:[%s5 + $0x20] sm:$0xff]
    %v2528 = vld [vmem:[%s5 + $0x28] sm:$0xff]
    %v2529 = vld [vmem:[%s5 + $0x30] sm:$0xff]
    %v2530 = vld [vmem:[%s5 + $0x38] sm:$0xff]
    %v2531 = vld [vmem:[%s5 + $0x40] sm:$0xff]
    %v2532 = vld [vmem:[%s5 + $0x48] sm:$0xff]
    %v2533 = vld [vmem:[%s5 + $0x50] sm:$0xff]
    %v2534 = vld [vmem:[%s5 + $0x58] sm:$0xff]
    %v2535 = vld [vmem:[%s5 + $0x60] sm:$0xff]
    %v2536 = vld [vmem:[%s5 + $0x68] sm:$0xff]
    %v2537 = vld [vmem:[%s5 + $0x70] sm:$0xff]
    %v2538 = vld [vmem:[%s5 + $0x78] sm:$0xff]
    %v2539 = vld [vmem:[%s5 + $0x80] sm:$0xff]
    %v2540 = vld [vmem:[%s5 + $0x88] sm:$0xff]
    %v2541 = vld [vmem:[%s5 + $0x90] sm:$0xff]
    %v2542 = vld [vmem:[%s5 + $0x98] sm:$0xff]
    %v2543 = vld [vmem:[%s5 + $0xa0] sm:$0xff]
    %v2544 = vld [vmem:[%s5 + $0xa8] sm:$0xff]
    %v2545 = vld [vmem:[%s5 + $0xb0] sm:$0xff]
    %v2546 = vld [vmem:[%s5 + $0xb8] sm:$0xff]
    %v2547 = vld [vmem:[%s6] sm:$0x1]
    %v2549 = vperm.slane %v2547, 0
    %v2552 = vsel %vm1845, %v2522, 0
    %2554 = vmatpush.msra.mxu0 %v2538
    %2555 = vmatpush.msra.mxu0 %v2537
    %2556 = vmatpush.msra.mxu0 %v2536
    %2557 = vmatpush.msra.mxu0 %v2535
    %2558 = vmatpush.msra.mxu0 %v2534
    %2559 = vmatpush.msra.mxu0 %v2533
    %2560 = vmatpush.msra.mxu0 %v2532
    %2561 = vmatpush.msra.mxu0 %v2531
    %2562 = vmatpush.msra.mxu0 %v2530
    %2563 = vmatpush.msra.mxu0 %v2529
    %2564 = vmatpush.msra.mxu0 %v2528
    %2565 = vmatpush.msra.mxu0 %v2527
    %2566 = vmatpush.msra.mxu0 %v2526
    %2567 = vmatpush.msra.mxu0 %v2525
    %2568 = vmatpush.msra.mxu0 %v2524
    %2569 = vmatpush.msra.mxu0 %v2523
    %2570 = vmatmul.f32.gmra.mxu0 %v2521
    %v2571 = vpop.f32.mrf.mxu0
    %v2572 = vadd.f32 %v2549, %v2571
    %2573 = vdwg.mxu0
    %2574 = vmatpush.msra.mxu0 0.0
    %2575 = vmatpush.msra.mxu0 0.0
    %2576 = vmatpush.msra.mxu0 0.0
    %2577 = vmatpush.msra.mxu0 0.0
    %2578 = vmatpush.msra.mxu0 0.0
    %2579 = vmatpush.msra.mxu0 0.0
    %2580 = vmatpush.msra.mxu0 0.0
    %2581 = vmatpush.msra.mxu0 0.0
    %2582 = vmatpush.msra.mxu0 %v2546
    %2583 = vmatpush.msra.mxu0 %v2545
    %2584 = vmatpush.msra.mxu0 %v2544
    %2585 = vmatpush.msra.mxu0 %v2543
    %2586 = vmatpush.msra.mxu0 %v2542
    %2587 = vmatpush.msra.mxu0 %v2541
    %2588 = vmatpush.msra.mxu0 %v2540
    %2589 = vmatpush.msra.mxu0 %v2539
    %2590 = vmatmul.f32.gmra.mxu0 %v2552
    %v2591 = vpop.f32.mrf.mxu0
    %v2592 = vadd.f32 %v2572, %v2591
    %2593 = vdwg.mxu0
    %v2594 = vmul.f32 %v2592, 0.33333334
    %2595 = vst [vmem:[#allocation2] sm:$0x3] %v2594
    // Predicated region
    $region30: #{tpu_custom_call.1} parent=1 // pred_check
      _
    $region31: #{tpu_custom_call.1} parent=1 // pred_check_branch
      %2597 = sbr.rel (0) target = $region33
    $region32: #{tpu_custom_call.1} parent=1 // pred_region
      %2599 = vsyncadd [#allocation3], 0
      %s2601 = sshll.u32 [#allocation2], 4
      %s2602 = int_to_ptr.vmem [resolvable:$true] %s2601
      %s2603 = sshll.u32 %s7, 4
      %s2604 = int_to_ptr.hbm [resolvable:$true] %s2603
      %2606 = dma.vmem_to_hbm [thread:$0]  %s2602, 32, %s2604, [#allocation3]
    $region33: #{tpu_custom_call.1} parent=1 // pred_fallthru
      _
    // Predicated region
    $region34: #{tpu_custom_call.1} parent=1 // pred_check
      _
    $region35: #{tpu_custom_call.1} parent=1 // pred_check_branch
      %2608 = sbr.rel (0) target = $region37
    $region36: #{tpu_custom_call.1} parent=1 // pred_region
      %2610 = dma.done [#allocation3], 32
    $region37: #{tpu_custom_call.1} parent=1 // pred_fallthru
      _
    %2611 = vsyncpa [#allocation3], 1

</llo_original>
